<compile_context>
chip_gen: v5e
topology: v5e:2x2
jax: 0.10.0
libtpu: 0.0.40
codegen_flags: <defaults>
</compile_context>

<pallas_src>
import functools

import jax
import jax.numpy as jnp
from jax.experimental import pallas as pl
from jax.experimental.pallas import tpu as pltpu


# --------------------------------- helpers -----------------------------------

def _round_up(n, m):
    return -(-n // m) * m


def _choose_batch_tile(B, S, target_rows=512):
    """Batch elements per block: ~target_rows rows, divides B, >=2 grid steps."""
    tb = max(1, min(B, max(1, target_rows // max(S, 1))))
    while B % tb:
        tb -= 1
    # Keep at least 2 grid steps when possible (pipelining + both TCs on v7x).
    if B // tb < 2 <= B:
        tb = max(1, B // 2)
        while B % tb:
            tb -= 1
    return tb


# --------------------------------- kernel ------------------------------------

def gated_layer_kernel(x_ref, ln_ref, wqkv_ref, bqkv_ref, wo_ref, bo_ref,
                       w1_ref, b1_ref, w2_ref, b2_ref,
                       gw3_ref, gu2_ref, gug_ref, gbg_ref,
                       o_ref, *, n_head, seq_len, d_logical):
    x = x_ref[...]                          # (M, Dp) f32, padded lanes are zero
    M, Dp = x.shape
    S = seq_len
    TB = M // S                             # batches in this block
    nh = n_head
    dhp = Dp // nh                          # padded head dim
    dh = d_logical // nh                    # logical head dim
    scale = 1.0 / (dh ** 0.5)
    inv_d = 1.0 / d_logical
    cdt = jnp.bfloat16                      # MXU input dtype (f32 accumulation)

    lane = jax.lax.broadcasted_iota(jnp.int32, (1, Dp), 1)
    mask = (lane < d_logical).astype(jnp.float32)   # masked LN statistics

    def layer_norm(v, gamma, beta, eps=1e-5):
        # v has zero padded lanes; gamma/beta are zero-padded -> output pad = 0.
        mu = jnp.sum(v, axis=-1, keepdims=True) * inv_d
        diff = (v - mu) * mask
        var = jnp.sum(diff * diff, axis=-1, keepdims=True) * inv_d
        return diff * jax.lax.rsqrt(var + eps) * gamma + beta

    def gru_gate(xs, y, w3, u2, ug, bg2):
        # w3 = [Wr|Wz|Wg] (Dp,3Dp) on y; u2 = [Ur|Uz] (Dp,2Dp) on xs; ug on r*xs.
        yw = jnp.dot(y.astype(cdt), w3, preferred_element_type=jnp.float32)   # (M,3Dp)
        xu = jnp.dot(xs.astype(cdt), u2, preferred_element_type=jnp.float32)  # (M,2Dp)
        rz = jax.nn.sigmoid(yw[:, :2 * Dp] + xu - bg2)     # one wide EUP stream
        r = rz[:, :Dp]
        z = rz[:, Dp:]
        h = jnp.tanh(yw[:, 2 * Dp:]
                     + jnp.dot((r * xs).astype(cdt), ug,
                               preferred_element_type=jnp.float32))
        return xs + z * (h - xs)            # == (1-z)*xs + z*h ; pad lanes stay 0

    # ---- sublayer 1: pre-LN -> multi-head self-attention -> GRU gate ----
    xn = layer_norm(x, ln_ref[0:1, :], ln_ref[1:2, :])
    qkv = (jnp.dot(xn.astype(cdt), wqkv_ref[...],
                   preferred_element_type=jnp.float32) + bqkv_ref[...])       # (M,3Dp)
    qkv_b = qkv.astype(cdt)                 # single bf16 cast for all q/k/v heads

    attn = jnp.zeros((M, Dp), jnp.float32)
    for h in range(nh):                     # only heads unrolled; batch is einsum'd
        q_h = qkv_b[:, h * dhp:(h + 1) * dhp].reshape(TB, S, dhp)
        k_h = qkv_b[:, Dp + h * dhp:Dp + (h + 1) * dhp].reshape(TB, S, dhp)
        v_h = qkv_b[:, 2 * Dp + h * dhp:2 * Dp + (h + 1) * dhp].reshape(TB, S, dhp)
        s = jnp.einsum('bqd,bkd->bqk', q_h, k_h,
                       preferred_element_type=jnp.float32) * scale
        s = s - jnp.max(s, axis=-1, keepdims=True)
        p = jnp.exp(s)
        p = p * pl.reciprocal(jnp.sum(p, axis=-1, keepdims=True), approx=True)
        ctx_h = jnp.einsum('bqk,bkd->bqd', p.astype(cdt), v_h,
                           preferred_element_type=jnp.float32)
        # Fold the output projection per head: no ctx scratch, no concat.
        attn = attn + jnp.dot(ctx_h.reshape(M, dhp).astype(cdt),
                              wo_ref[h * dhp:(h + 1) * dhp, :],
                              preferred_element_type=jnp.float32)
    attn = attn + bo_ref[...]

    x1 = gru_gate(x, attn, gw3_ref[0], gu2_ref[0], gug_ref[0], gbg_ref[0:1, :])
    # dropout1: identity (eval mode / p=0)

    # ---- sublayer 2: pre-LN -> FFN (Linear/ReLU/Linear) -> GRU gate ----
    xn2 = layer_norm(x1, ln_ref[2:3, :], ln_ref[3:4, :])
    hidden = jnp.maximum(
        jnp.dot(xn2.astype(cdt), w1_ref[...], preferred_element_type=jnp.float32)
        + b1_ref[...], 0.0)
    ffn = (jnp.dot(hidden.astype(cdt), w2_ref[...],
                   preferred_element_type=jnp.float32) + b2_ref[...])

    x2 = gru_gate(x1, ffn, gw3_ref[1], gu2_ref[1], gug_ref[1], gbg_ref[1:2, :])
    # dropout2: identity (eval mode / p=0)

    o_ref[...] = x2.astype(o_ref.dtype)     # lane-dense unmasked store


# -------------------------------- wrapper -------------------------------------

def gated_layer(x, params, n_head, lane_multiple=128, target_rows=512):
    B, S, D = x.shape
    ln_w, w_attn, b_attn, w1, b1, w2, b2, gate_w, gate_bg = params
    assert D % n_head == 0
    dh = D // n_head
    H = w1.shape[1]

    # Padded (lane-dense) dims; Dp must split evenly over heads.
    Dp = _round_up(D, lane_multiple)
    while Dp % n_head:
        Dp += lane_multiple
    dhp = Dp // n_head
    Hp = _round_up(H, lane_multiple)

    wdt = jnp.bfloat16
    f32 = jnp.float32

    def pad2(a, rows, cols):
        return jnp.pad(a, ((0, rows - a.shape[0]), (0, cols - a.shape[1])))

    def pad_head_cols(w):       # (D, D) -> (Dp, Dp); output cols head-blocked
        w3 = w.reshape(D, n_head, dh)
        w3 = jnp.pad(w3, ((0, Dp - D), (0, 0), (0, dhp - dh)))
        return w3.reshape(Dp, Dp)

    def pad_head_rows(w):       # (D, D) -> (Dp, Dp); input rows head-blocked
        w3 = w.reshape(n_head, dh, D)
        w3 = jnp.pad(w3, ((0, 0), (0, dhp - dh), (0, Dp - D)))
        return w3.reshape(Dp, Dp)

    def pad_head_vec(b):        # (D,) -> (Dp,) head-blocked
        bb = b.reshape(n_head, dh)
        return jnp.pad(bb, ((0, 0), (0, dhp - dh))).reshape(Dp)

    # --- fuse, pad & cast weights once in the wrapper ---
    wqkv = jnp.concatenate([pad_head_cols(w_attn[i]) for i in range(3)],
                           axis=1).astype(wdt)                                  # (Dp,3Dp)
    bqkv = jnp.concatenate([pad_head_vec(b_attn[i]) for i in range(3)]
                           )[None, :].astype(f32)                               # (1,3Dp)
    wo = pad_head_rows(w_attn[3]).astype(wdt)                                   # (Dp,Dp)
    bo = jnp.pad(b_attn[3], (0, Dp - D))[None, :].astype(f32)                   # (1,Dp)

    ln = pad2(ln_w, 4, Dp).astype(f32)                                          # (4,Dp)

    w1c = pad2(w1, Dp, Hp).astype(wdt)
    b1c = pad2(b1.reshape(1, -1), 1, Hp).astype(f32)
    w2c = pad2(w2, Hp, Dp).astype(wdt)
    b2c = pad2(b2.reshape(1, -1), 1, Dp).astype(f32)

    def padg(w):
        return pad2(w, Dp, Dp)

    # gate_w: (2, 6, D, D) ordered [Wr, Ur, Wz, Uz, Wg, Ug]
    gw3 = jnp.stack([jnp.concatenate([padg(gate_w[g, 0]), padg(gate_w[g, 2]),
                                      padg(gate_w[g, 4])], axis=1)
                     for g in range(2)]).astype(wdt)                            # (2,Dp,3Dp)
    gu2 = jnp.stack([jnp.concatenate([padg(gate_w[g, 1]), padg(gate_w[g, 3])],
                                     axis=1)
                     for g in range(2)]).astype(wdt)                            # (2,Dp,2Dp)
    gug = jnp.stack([padg(gate_w[g, 5]) for g in range(2)]).astype(wdt)         # (2,Dp,Dp)
    bg_pad = jnp.pad(gate_bg, ((0, 0), (0, Dp - D)))
    gbg2 = jnp.concatenate([jnp.zeros_like(bg_pad), bg_pad],
                           axis=1).astype(f32)                                  # (2,2Dp): [0|bg]

    # --- row tiling: TB batch elements (TB*S rows) per grid step ---
    TB = _choose_batch_tile(B, S, target_rows)
    if (TB * S) % 8 != 0 and TB != B:
        TB = B      # full-rows block sidesteps the (8,128) divisibility rule
    grid = (B // TB,)
    M = TB * S

    # Lane-dense padded activations.
    x2d = jnp.pad(x.reshape(B * S, D), ((0, 0), (0, Dp - D)))

    weights = (ln, wqkv, bqkv, wo, bo, w1c, b1c, w2c, b2c, gw3, gu2, gug, gbg2)

    def wspec(a):
        n = a.ndim
        return pl.BlockSpec(a.shape, lambda b, _n=n: (0,) * _n)

    # --- exact-ish VMEM accounting, capped with headroom for v7x's 64 MiB ---
    in_blk = M * Dp * x2d.dtype.itemsize
    out_blk = M * Dp * 4
    weight_bytes = sum(int(a.size) * a.dtype.itemsize for a in weights)
    # qkv (f32 + bf16), gate slabs, FFN hidden, attn/x1/x2 temporaries (f32).
    temp_bytes = M * 4 * (3 * Dp * 3 + 2 * Hp + 10 * Dp)
    need = 2 * (in_blk + out_blk) + 2 * weight_bytes + temp_bytes + (4 << 20)
    try:
        cap = int(pltpu.get_tpu_info().vmem_capacity_bytes) * 3 // 4
    except Exception:
        cap = 48 << 20
    cap = max(cap, 32 << 20)
    vmem_limit = int(min(max(need, 32 << 20), cap))

    kernel = functools.partial(gated_layer_kernel, n_head=n_head, seq_len=S,
                               d_logical=D)

    out2d = pl.pallas_call(
        kernel,
        out_shape=jax.ShapeDtypeStruct((B * S, Dp), x.dtype),
        grid_spec=pltpu.PrefetchScalarGridSpec(
            num_scalar_prefetch=0,
            grid=grid,
            in_specs=[pl.BlockSpec((M, Dp), lambda b: (b, 0))]
                     + [wspec(a) for a in weights],
            out_specs=pl.BlockSpec((M, Dp), lambda b: (b, 0)),
        ),
        compiler_params=pltpu.CompilerParams(
            dimension_semantics=("parallel",),
            vmem_limit_bytes=vmem_limit,
        ),
    )(x2d, *weights)

    return out2d[:, :D].reshape(B, S, D)


# -------------------------- pure-JAX reference --------------------------------

def reference(x, params, n_head):
    ln_w, w_attn, b_attn, w1, b1, w2, b2, gate_w, gate_bg = params
    x = x.astype(jnp.float32)
    B, S, D = x.shape
    dh = D // n_head

    def ln(v, g, b):
        mu = v.mean(-1, keepdims=True)
        var = ((v - mu) ** 2).mean(-1, keepdims=True)
        return (v - mu) / jnp.sqrt(var + 1e-5) * g + b

    def gate(xs, y, gw, bg):
        r = jax.nn.sigmoid(y @ gw[0] + xs @ gw[1])
        z = jax.nn.sigmoid(y @ gw[2] + xs @ gw[3] - bg)
        h = jnp.tanh(y @ gw[4] + (r * xs) @ gw[5])
        return (1 - z) * xs + z * h

    skip = x
    xn = ln(x, ln_w[0], ln_w[1])
    q = (xn @ w_attn[0] + b_attn[0]).reshape(B, S, n_head, dh)
    k = (xn @ w_attn[1] + b_attn[1]).reshape(B, S, n_head, dh)
    v = (xn @ w_attn[2] + b_attn[2]).reshape(B, S, n_head, dh)
    s = jnp.einsum('bqhd,bkhd->bhqk', q, k) / jnp.sqrt(dh)
    p = jax.nn.softmax(s, axis=-1)
    ctx = jnp.einsum('bhqk,bkhd->bqhd', p, v).reshape(B, S, D)
    attn = ctx @ w_attn[3] + b_attn[3]
    x1 = gate(skip, attn, gate_w[0], gate_bg[0])

    xn2 = ln(x1, ln_w[2], ln_w[3])
    ffn = jnp.maximum(xn2 @ w1 + b1, 0.0) @ w2 + b2
    return gate(x1, ffn, gate_w[1], gate_bg[1])


# ---------------------------------- main ---------------------------------------

if __name__ == "__main__":
    B, S, D, H, NH = 2, 8, 32, 64, 4   # batch, seq, d_model, ffn_hidden, n_head
    key = jax.random.PRNGKey(0)
    k_x, k_attn, k_w1, k_w2, k_gate = jax.random.split(key, 5)

    x = jax.random.normal(k_x, (B, S, D), jnp.float32)

    # LayerNorm params: rows [ln1_gamma, ln1_beta, ln2_gamma, ln2_beta]
    ln_w = jnp.stack([jnp.ones(D), jnp.zeros(D), jnp.ones(D), jnp.zeros(D)]).astype(jnp.float32)
    # Attention: [Wq, Wk, Wv, Wo] each (D, D) applied-orientation; biases (4, D)
    w_attn = 0.1 * jax.random.normal(k_attn, (4, D, D), jnp.float32)
    b_attn = jnp.zeros((4, D), jnp.float32)
    # FFN: Linear(D->H), ReLU, Linear(H->D)
    w1 = 0.1 * jax.random.normal(k_w1, (D, H), jnp.float32)
    b1 = jnp.zeros((1, H), jnp.float32)
    w2 = 0.1 * jax.random.normal(k_w2, (H, D), jnp.float32)
    b2 = jnp.zeros((1, D), jnp.float32)
    # GRU gates: (2 gates, 6 matrices [Wr,Ur,Wz,Uz,Wg,Ug], D, D); bias bg init 2.0
    gate_w = 0.1 * jax.random.normal(k_gate, (2, 6, D, D), jnp.float32)
    gate_bg = jnp.full((2, D), 2.0, jnp.float32)

    params = (ln_w, w_attn, b_attn, w1, b1, w2, b2, gate_w, gate_bg)

    out = gated_layer(x, params, NH)
    out = jax.block_until_ready(out)

    ref = reference(x, params, NH)
    assert out.shape == (B, S, D), out.shape
    # bf16 matmul inputs (f32 accumulation) + approx reciprocal -> loosened tol.
    assert jnp.allclose(out, ref, atol=3e-2, rtol=3e-2), float(jnp.max(jnp.abs(out - ref)))

    print("KERNEL_OK")
</pallas_src>

<mosaic_0001>
module attributes {stable_mosaic.version = 11 : i64} {
  func.func @gated_layer_kernel(%arg0: i32, %arg1: memref<8x128xf32, #tpu.memory_space<vmem>>, %arg2: memref<4x128xf32, #tpu.memory_space<vmem>>, %arg3: memref<128x384xbf16, #tpu.memory_space<vmem>>, %arg4: memref<1x384xf32, #tpu.memory_space<vmem>>, %arg5: memref<128x128xbf16, #tpu.memory_space<vmem>>, %arg6: memref<1x128xf32, #tpu.memory_space<vmem>>, %arg7: memref<128x128xbf16, #tpu.memory_space<vmem>>, %arg8: memref<1x128xf32, #tpu.memory_space<vmem>>, %arg9: memref<128x128xbf16, #tpu.memory_space<vmem>>, %arg10: memref<1x128xf32, #tpu.memory_space<vmem>>, %arg11: memref<2x128x384xbf16, #tpu.memory_space<vmem>>, %arg12: memref<2x128x256xbf16, #tpu.memory_space<vmem>>, %arg13: memref<2x128x128xbf16, #tpu.memory_space<vmem>>, %arg14: memref<2x256xf32, #tpu.memory_space<vmem>>, %arg15: memref<8x128xf32, #tpu.memory_space<vmem>>) attributes {dimension_semantics = [#tpu.dimension_semantics<parallel>], iteration_bounds = array<i64: 2>, scalar_prefetch = 0 : i64, scratch_operands = 0 : i64, tpu.core_type = #tpu.core_type<tc>, window_params = [{transform_indices = @transform_0, window_bounds = array<i64: 8, 128>}, {pipeline_mode = #tpu.pipeline_mode<synchronous>, transform_indices = @transform_1, window_bounds = array<i64: 4, 128>}, {pipeline_mode = #tpu.pipeline_mode<synchronous>, transform_indices = @transform_2, window_bounds = array<i64: 128, 384>}, {pipeline_mode = #tpu.pipeline_mode<synchronous>, transform_indices = @transform_3, window_bounds = array<i64: 1, 384>}, {pipeline_mode = #tpu.pipeline_mode<synchronous>, transform_indices = @transform_4, window_bounds = array<i64: 128, 128>}, {pipeline_mode = #tpu.pipeline_mode<synchronous>, transform_indices = @transform_5, window_bounds = array<i64: 1, 128>}, {pipeline_mode = #tpu.pipeline_mode<synchronous>, transform_indices = @transform_6, window_bounds = array<i64: 128, 128>}, {pipeline_mode = #tpu.pipeline_mode<synchronous>, transform_indices = @transform_7, window_bounds = array<i64: 1, 128>}, {pipeline_mode = #tpu.pipeline_mode<synchronous>, transform_indices = @transform_8, window_bounds = array<i64: 128, 128>}, {pipeline_mode = #tpu.pipeline_mode<synchronous>, transform_indices = @transform_9, window_bounds = array<i64: 1, 128>}, {pipeline_mode = #tpu.pipeline_mode<synchronous>, transform_indices = @transform_10, window_bounds = array<i64: 2, 128, 384>}, {pipeline_mode = #tpu.pipeline_mode<synchronous>, transform_indices = @transform_11, window_bounds = array<i64: 2, 128, 256>}, {pipeline_mode = #tpu.pipeline_mode<synchronous>, transform_indices = @transform_12, window_bounds = array<i64: 2, 128, 128>}, {pipeline_mode = #tpu.pipeline_mode<synchronous>, transform_indices = @transform_13, window_bounds = array<i64: 2, 256>}, {transform_indices = @transform_14, window_bounds = array<i64: 8, 128>}]} {
    %c0 = arith.constant 0 : index
    %c0_0 = arith.constant 0 : index
    %0 = vector.load %arg1[%c0, %c0_0] : memref<8x128xf32, #tpu.memory_space<vmem>>, vector<8x128xf32>
    %1 = tpu.iota {dimensions = array<i32: 1>} : vector<1x128xi32>
    %c32_i32 = arith.constant 32 : i32
    %2 = vector.broadcast %c32_i32 : i32 to vector<1x128xi32>
    %3 = arith.cmpi slt, %1, %2 : vector<1x128xi32>
    %4 = arith.extui %3 : vector<1x128xi1> to vector<1x128xi32>
    %5 = arith.sitofp %4 : vector<1x128xi32> to vector<1x128xf32>
    %c0_1 = arith.constant 0 : index
    %c0_2 = arith.constant 0 : index
    %6 = vector.load %arg2[%c0_1, %c0_2] : memref<4x128xf32, #tpu.memory_space<vmem>>, vector<1x128xf32>
    %c1 = arith.constant 1 : index
    %c0_3 = arith.constant 0 : index
    %7 = vector.load %arg2[%c1, %c0_3] : memref<4x128xf32, #tpu.memory_space<vmem>>, vector<1x128xf32>
    %cst = arith.constant dense<0.000000e+00> : vector<8xf32>
    %8 = vector.multi_reduction <add>, %0, %cst [1] : vector<8x128xf32> to vector<8xf32>
    %9 = vector.shape_cast %8 : vector<8xf32> to vector<8x1xf32>
    %cst_4 = arith.constant 3.125000e-02 : f32
    %10 = vector.broadcast %cst_4 : f32 to vector<8x1xf32>
    %11 = arith.mulf %9, %10 : vector<8x1xf32>
    %12 = vector.broadcast %11 : vector<8x1xf32> to vector<8x128xf32>
    %13 = arith.subf %0, %12 : vector<8x128xf32>
    %14 = vector.broadcast %5 : vector<1x128xf32> to vector<8x128xf32>
    %15 = arith.mulf %13, %14 : vector<8x128xf32>
    %16 = arith.mulf %15, %15 : vector<8x128xf32>
    %cst_5 = arith.constant dense<0.000000e+00> : vector<8xf32>
    %17 = vector.multi_reduction <add>, %16, %cst_5 [1] : vector<8x128xf32> to vector<8xf32>
    %18 = vector.shape_cast %17 : vector<8xf32> to vector<8x1xf32>
    %cst_6 = arith.constant 3.125000e-02 : f32
    %19 = vector.broadcast %cst_6 : f32 to vector<8x1xf32>
    %20 = arith.mulf %18, %19 : vector<8x1xf32>
    %cst_7 = arith.constant 9.99999974E-6 : f32
    %21 = vector.broadcast %cst_7 : f32 to vector<8x1xf32>
    %22 = arith.addf %20, %21 : vector<8x1xf32>
    %23 = math.rsqrt %22 : vector<8x1xf32>
    %24 = vector.broadcast %23 : vector<8x1xf32> to vector<8x128xf32>
    %25 = arith.mulf %15, %24 : vector<8x128xf32>
    %26 = vector.broadcast %6 : vector<1x128xf32> to vector<8x128xf32>
    %27 = arith.mulf %25, %26 : vector<8x128xf32>
    %28 = vector.broadcast %7 : vector<1x128xf32> to vector<8x128xf32>
    %29 = arith.addf %27, %28 : vector<8x128xf32>
    %30 = arith.truncf %29 : vector<8x128xf32> to vector<8x128xbf16>
    %c0_8 = arith.constant 0 : index
    %c0_9 = arith.constant 0 : index
    %31 = vector.load %arg3[%c0_8, %c0_9] : memref<128x384xbf16, #tpu.memory_space<vmem>>, vector<128x384xbf16>
    %cst_10 = arith.constant dense<0.000000e+00> : vector<8x384xf32>
    %32 = tpu.matmul %30, %31, %cst_10 {dimension_numbers = #tpu.dot_dimension_numbers<[1], [0], [0], [1], [0, 0, 1, 1], [], []>} : vector<8x128xbf16>, vector<128x384xbf16>, vector<8x384xf32> -> vector<8x384xf32>
    %c0_11 = arith.constant 0 : index
    %c0_12 = arith.constant 0 : index
    %33 = vector.load %arg4[%c0_11, %c0_12] : memref<1x384xf32, #tpu.memory_space<vmem>>, vector<1x384xf32>
    %34 = vector.broadcast %33 : vector<1x384xf32> to vector<8x384xf32>
    %35 = arith.addf %32, %34 : vector<8x384xf32>
    %36 = arith.truncf %35 : vector<8x384xf32> to vector<8x384xbf16>
    %cst_13 = arith.constant 0.000000e+00 : f32
    %37 = vector.broadcast %cst_13 : f32 to vector<8x128xf32>
    %38 = vector.extract_strided_slice %36 {offsets = [0, 0], sizes = [8, 32], strides = [1, 1]} : vector<8x384xbf16> to vector<8x32xbf16>
    %39 = vector.shape_cast %38 : vector<8x32xbf16> to vector<1x8x32xbf16>
    %40 = vector.extract_strided_slice %36 {offsets = [0, 128], sizes = [8, 32], strides = [1, 1]} : vector<8x384xbf16> to vector<8x32xbf16>
    %41 = vector.shape_cast %40 : vector<8x32xbf16> to vector<1x8x32xbf16>
    %42 = vector.extract_strided_slice %36 {offsets = [0, 256], sizes = [8, 32], strides = [1, 1]} : vector<8x384xbf16> to vector<8x32xbf16>
    %43 = vector.shape_cast %42 : vector<8x32xbf16> to vector<1x8x32xbf16>
    "tpu.trace_start"() <{level = 10 : i32, message = "bqd,bkd->bqk"}> : () -> ()
    %cst_14 = arith.constant dense<0.000000e+00> : vector<1x8x8xf32>
    %44 = tpu.matmul %39, %41, %cst_14 {dimension_numbers = #tpu.dot_dimension_numbers<[2], [2], [1], [1], [0, 0, 0, 1, 1, 1], [0], [0]>} : vector<1x8x32xbf16>, vector<1x8x32xbf16>, vector<1x8x8xf32> -> vector<1x8x8xf32>
    "tpu.trace_stop"() : () -> ()
    %cst_15 = arith.constant 0.353553385 : f32
    %45 = vector.broadcast %cst_15 : f32 to vector<1x8x8xf32>
    %46 = arith.mulf %44, %45 : vector<1x8x8xf32>
    %cst_16 = arith.constant dense<0xFF800000> : vector<1x8xf32>
    %47 = vector.multi_reduction <maximumf>, %46, %cst_16 [2] : vector<1x8x8xf32> to vector<1x8xf32>
    %48 = vector.shape_cast %47 : vector<1x8xf32> to vector<1x8x1xf32>
    %49 = vector.broadcast %48 : vector<1x8x1xf32> to vector<1x8x8xf32>
    %50 = arith.subf %46, %49 : vector<1x8x8xf32>
    %51 = math.exp %50 : vector<1x8x8xf32>
    %cst_17 = arith.constant dense<0.000000e+00> : vector<1x8xf32>
    %52 = vector.multi_reduction <add>, %51, %cst_17 [2] : vector<1x8x8xf32> to vector<1x8xf32>
    %53 = vector.shape_cast %52 : vector<1x8xf32> to vector<1x8x1xf32>
    %54 = tpu.reciprocal %53 {approx = true} : vector<1x8x1xf32> -> vector<1x8x1xf32>
    %55 = vector.broadcast %54 : vector<1x8x1xf32> to vector<1x8x8xf32>
    %56 = arith.mulf %51, %55 : vector<1x8x8xf32>
    %57 = arith.truncf %56 : vector<1x8x8xf32> to vector<1x8x8xbf16>
    "tpu.trace_start"() <{level = 10 : i32, message = "bqk,bkd->bqd"}> : () -> ()
    %cst_18 = arith.constant dense<0.000000e+00> : vector<1x8x32xf32>
    %58 = tpu.matmul %57, %43, %cst_18 {dimension_numbers = #tpu.dot_dimension_numbers<[2], [1], [1], [2], [0, 0, 0, 1, 1, 2], [0], [0]>} : vector<1x8x8xbf16>, vector<1x8x32xbf16>, vector<1x8x32xf32> -> vector<1x8x32xf32>
    "tpu.trace_stop"() : () -> ()
    %59 = vector.shape_cast %58 : vector<1x8x32xf32> to vector<8x32xf32>
    %60 = arith.truncf %59 : vector<8x32xf32> to vector<8x32xbf16>
    %c0_19 = arith.constant 0 : index
    %c0_20 = arith.constant 0 : index
    %61 = vector.load %arg5[%c0_19, %c0_20] : memref<128x128xbf16, #tpu.memory_space<vmem>>, vector<32x128xbf16>
    %cst_21 = arith.constant dense<0.000000e+00> : vector<8x128xf32>
    %62 = tpu.matmul %60, %61, %cst_21 {dimension_numbers = #tpu.dot_dimension_numbers<[1], [0], [0], [1], [0, 0, 1, 1], [], []>} : vector<8x32xbf16>, vector<32x128xbf16>, vector<8x128xf32> -> vector<8x128xf32>
    %63 = arith.addf %37, %62 : vector<8x128xf32>
    %64 = vector.extract_strided_slice %36 {offsets = [0, 32], sizes = [8, 32], strides = [1, 1]} : vector<8x384xbf16> to vector<8x32xbf16>
    %65 = vector.shape_cast %64 : vector<8x32xbf16> to vector<1x8x32xbf16>
    %66 = vector.extract_strided_slice %36 {offsets = [0, 160], sizes = [8, 32], strides = [1, 1]} : vector<8x384xbf16> to vector<8x32xbf16>
    %67 = vector.shape_cast %66 : vector<8x32xbf16> to vector<1x8x32xbf16>
    %68 = vector.extract_strided_slice %36 {offsets = [0, 288], sizes = [8, 32], strides = [1, 1]} : vector<8x384xbf16> to vector<8x32xbf16>
    %69 = vector.shape_cast %68 : vector<8x32xbf16> to vector<1x8x32xbf16>
    "tpu.trace_start"() <{level = 10 : i32, message = "bqd,bkd->bqk"}> : () -> ()
    %cst_22 = arith.constant dense<0.000000e+00> : vector<1x8x8xf32>
    %70 = tpu.matmul %65, %67, %cst_22 {dimension_numbers = #tpu.dot_dimension_numbers<[2], [2], [1], [1], [0, 0, 0, 1, 1, 1], [0], [0]>} : vector<1x8x32xbf16>, vector<1x8x32xbf16>, vector<1x8x8xf32> -> vector<1x8x8xf32>
    "tpu.trace_stop"() : () -> ()
    %cst_23 = arith.constant 0.353553385 : f32
    %71 = vector.broadcast %cst_23 : f32 to vector<1x8x8xf32>
    %72 = arith.mulf %70, %71 : vector<1x8x8xf32>
    %cst_24 = arith.constant dense<0xFF800000> : vector<1x8xf32>
    %73 = vector.multi_reduction <maximumf>, %72, %cst_24 [2] : vector<1x8x8xf32> to vector<1x8xf32>
    %74 = vector.shape_cast %73 : vector<1x8xf32> to vector<1x8x1xf32>
    %75 = vector.broadcast %74 : vector<1x8x1xf32> to vector<1x8x8xf32>
    %76 = arith.subf %72, %75 : vector<1x8x8xf32>
    %77 = math.exp %76 : vector<1x8x8xf32>
    %cst_25 = arith.constant dense<0.000000e+00> : vector<1x8xf32>
    %78 = vector.multi_reduction <add>, %77, %cst_25 [2] : vector<1x8x8xf32> to vector<1x8xf32>
    %79 = vector.shape_cast %78 : vector<1x8xf32> to vector<1x8x1xf32>
    %80 = tpu.reciprocal %79 {approx = true} : vector<1x8x1xf32> -> vector<1x8x1xf32>
    %81 = vector.broadcast %80 : vector<1x8x1xf32> to vector<1x8x8xf32>
    %82 = arith.mulf %77, %81 : vector<1x8x8xf32>
    %83 = arith.truncf %82 : vector<1x8x8xf32> to vector<1x8x8xbf16>
    "tpu.trace_start"() <{level = 10 : i32, message = "bqk,bkd->bqd"}> : () -> ()
    %cst_26 = arith.constant dense<0.000000e+00> : vector<1x8x32xf32>
    %84 = tpu.matmul %83, %69, %cst_26 {dimension_numbers = #tpu.dot_dimension_numbers<[2], [1], [1], [2], [0, 0, 0, 1, 1, 2], [0], [0]>} : vector<1x8x8xbf16>, vector<1x8x32xbf16>, vector<1x8x32xf32> -> vector<1x8x32xf32>
    "tpu.trace_stop"() : () -> ()
    %85 = vector.shape_cast %84 : vector<1x8x32xf32> to vector<8x32xf32>
    %86 = arith.truncf %85 : vector<8x32xf32> to vector<8x32xbf16>
    %c32 = arith.constant 32 : index
    %c0_27 = arith.constant 0 : index
    %87 = vector.load %arg5[%c32, %c0_27] : memref<128x128xbf16, #tpu.memory_space<vmem>>, vector<32x128xbf16>
    %cst_28 = arith.constant dense<0.000000e+00> : vector<8x128xf32>
    %88 = tpu.matmul %86, %87, %cst_28 {dimension_numbers = #tpu.dot_dimension_numbers<[1], [0], [0], [1], [0, 0, 1, 1], [], []>} : vector<8x32xbf16>, vector<32x128xbf16>, vector<8x128xf32> -> vector<8x128xf32>
    %89 = arith.addf %63, %88 : vector<8x128xf32>
    %90 = vector.extract_strided_slice %36 {offsets = [0, 64], sizes = [8, 32], strides = [1, 1]} : vector<8x384xbf16> to vector<8x32xbf16>
    %91 = vector.shape_cast %90 : vector<8x32xbf16> to vector<1x8x32xbf16>
    %92 = vector.extract_strided_slice %36 {offsets = [0, 192], sizes = [8, 32], strides = [1, 1]} : vector<8x384xbf16> to vector<8x32xbf16>
    %93 = vector.shape_cast %92 : vector<8x32xbf16> to vector<1x8x32xbf16>
    %94 = vector.extract_strided_slice %36 {offsets = [0, 320], sizes = [8, 32], strides = [1, 1]} : vector<8x384xbf16> to vector<8x32xbf16>
    %95 = vector.shape_cast %94 : vector<8x32xbf16> to vector<1x8x32xbf16>
    "tpu.trace_start"() <{level = 10 : i32, message = "bqd,bkd->bqk"}> : () -> ()
    %cst_29 = arith.constant dense<0.000000e+00> : vector<1x8x8xf32>
    %96 = tpu.matmul %91, %93, %cst_29 {dimension_numbers = #tpu.dot_dimension_numbers<[2], [2], [1], [1], [0, 0, 0, 1, 1, 1], [0], [0]>} : vector<1x8x32xbf16>, vector<1x8x32xbf16>, vector<1x8x8xf32> -> vector<1x8x8xf32>
    "tpu.trace_stop"() : () -> ()
    %cst_30 = arith.constant 0.353553385 : f32
    %97 = vector.broadcast %cst_30 : f32 to vector<1x8x8xf32>
    %98 = arith.mulf %96, %97 : vector<1x8x8xf32>
    %cst_31 = arith.constant dense<0xFF800000> : vector<1x8xf32>
    %99 = vector.multi_reduction <maximumf>, %98, %cst_31 [2] : vector<1x8x8xf32> to vector<1x8xf32>
    %100 = vector.shape_cast %99 : vector<1x8xf32> to vector<1x8x1xf32>
    %101 = vector.broadcast %100 : vector<1x8x1xf32> to vector<1x8x8xf32>
    %102 = arith.subf %98, %101 : vector<1x8x8xf32>
    %103 = math.exp %102 : vector<1x8x8xf32>
    %cst_32 = arith.constant dense<0.000000e+00> : vector<1x8xf32>
    %104 = vector.multi_reduction <add>, %103, %cst_32 [2] : vector<1x8x8xf32> to vector<1x8xf32>
    %105 = vector.shape_cast %104 : vector<1x8xf32> to vector<1x8x1xf32>
    %106 = tpu.reciprocal %105 {approx = true} : vector<1x8x1xf32> -> vector<1x8x1xf32>
    %107 = vector.broadcast %106 : vector<1x8x1xf32> to vector<1x8x8xf32>
    %108 = arith.mulf %103, %107 : vector<1x8x8xf32>
    %109 = arith.truncf %108 : vector<1x8x8xf32> to vector<1x8x8xbf16>
    "tpu.trace_start"() <{level = 10 : i32, message = "bqk,bkd->bqd"}> : () -> ()
    %cst_33 = arith.constant dense<0.000000e+00> : vector<1x8x32xf32>
    %110 = tpu.matmul %109, %95, %cst_33 {dimension_numbers = #tpu.dot_dimension_numbers<[2], [1], [1], [2], [0, 0, 0, 1, 1, 2], [0], [0]>} : vector<1x8x8xbf16>, vector<1x8x32xbf16>, vector<1x8x32xf32> -> vector<1x8x32xf32>
    "tpu.trace_stop"() : () -> ()
    %111 = vector.shape_cast %110 : vector<1x8x32xf32> to vector<8x32xf32>
    %112 = arith.truncf %111 : vector<8x32xf32> to vector<8x32xbf16>
    %c64 = arith.constant 64 : index
    %c0_34 = arith.constant 0 : index
    %113 = vector.load %arg5[%c64, %c0_34] : memref<128x128xbf16, #tpu.memory_space<vmem>>, vector<32x128xbf16>
    %cst_35 = arith.constant dense<0.000000e+00> : vector<8x128xf32>
    %114 = tpu.matmul %112, %113, %cst_35 {dimension_numbers = #tpu.dot_dimension_numbers<[1], [0], [0], [1], [0, 0, 1, 1], [], []>} : vector<8x32xbf16>, vector<32x128xbf16>, vector<8x128xf32> -> vector<8x128xf32>
    %115 = arith.addf %89, %114 : vector<8x128xf32>
    %116 = vector.extract_strided_slice %36 {offsets = [0, 96], sizes = [8, 32], strides = [1, 1]} : vector<8x384xbf16> to vector<8x32xbf16>
    %117 = vector.shape_cast %116 : vector<8x32xbf16> to vector<1x8x32xbf16>
    %118 = vector.extract_strided_slice %36 {offsets = [0, 224], sizes = [8, 32], strides = [1, 1]} : vector<8x384xbf16> to vector<8x32xbf16>
    %119 = vector.shape_cast %118 : vector<8x32xbf16> to vector<1x8x32xbf16>
    %120 = vector.extract_strided_slice %36 {offsets = [0, 352], sizes = [8, 32], strides = [1, 1]} : vector<8x384xbf16> to vector<8x32xbf16>
    %121 = vector.shape_cast %120 : vector<8x32xbf16> to vector<1x8x32xbf16>
    "tpu.trace_start"() <{level = 10 : i32, message = "bqd,bkd->bqk"}> : () -> ()
    %cst_36 = arith.constant dense<0.000000e+00> : vector<1x8x8xf32>
    %122 = tpu.matmul %117, %119, %cst_36 {dimension_numbers = #tpu.dot_dimension_numbers<[2], [2], [1], [1], [0, 0, 0, 1, 1, 1], [0], [0]>} : vector<1x8x32xbf16>, vector<1x8x32xbf16>, vector<1x8x8xf32> -> vector<1x8x8xf32>
    "tpu.trace_stop"() : () -> ()
    %cst_37 = arith.constant 0.353553385 : f32
    %123 = vector.broadcast %cst_37 : f32 to vector<1x8x8xf32>
    %124 = arith.mulf %122, %123 : vector<1x8x8xf32>
    %cst_38 = arith.constant dense<0xFF800000> : vector<1x8xf32>
    %125 = vector.multi_reduction <maximumf>, %124, %cst_38 [2] : vector<1x8x8xf32> to vector<1x8xf32>
    %126 = vector.shape_cast %125 : vector<1x8xf32> to vector<1x8x1xf32>
    %127 = vector.broadcast %126 : vector<1x8x1xf32> to vector<1x8x8xf32>
    %128 = arith.subf %124, %127 : vector<1x8x8xf32>
    %129 = math.exp %128 : vector<1x8x8xf32>
    %cst_39 = arith.constant dense<0.000000e+00> : vector<1x8xf32>
    %130 = vector.multi_reduction <add>, %129, %cst_39 [2] : vector<1x8x8xf32> to vector<1x8xf32>
    %131 = vector.shape_cast %130 : vector<1x8xf32> to vector<1x8x1xf32>
    %132 = tpu.reciprocal %131 {approx = true} : vector<1x8x1xf32> -> vector<1x8x1xf32>
    %133 = vector.broadcast %132 : vector<1x8x1xf32> to vector<1x8x8xf32>
    %134 = arith.mulf %129, %133 : vector<1x8x8xf32>
    %135 = arith.truncf %134 : vector<1x8x8xf32> to vector<1x8x8xbf16>
    "tpu.trace_start"() <{level = 10 : i32, message = "bqk,bkd->bqd"}> : () -> ()
    %cst_40 = arith.constant dense<0.000000e+00> : vector<1x8x32xf32>
    %136 = tpu.matmul %135, %121, %cst_40 {dimension_numbers = #tpu.dot_dimension_numbers<[2], [1], [1], [2], [0, 0, 0, 1, 1, 2], [0], [0]>} : vector<1x8x8xbf16>, vector<1x8x32xbf16>, vector<1x8x32xf32> -> vector<1x8x32xf32>
    "tpu.trace_stop"() : () -> ()
    %137 = vector.shape_cast %136 : vector<1x8x32xf32> to vector<8x32xf32>
    %138 = arith.truncf %137 : vector<8x32xf32> to vector<8x32xbf16>
    %c96 = arith.constant 96 : index
    %c0_41 = arith.constant 0 : index
    %139 = vector.load %arg5[%c96, %c0_41] : memref<128x128xbf16, #tpu.memory_space<vmem>>, vector<32x128xbf16>
    %cst_42 = arith.constant dense<0.000000e+00> : vector<8x128xf32>
    %140 = tpu.matmul %138, %139, %cst_42 {dimension_numbers = #tpu.dot_dimension_numbers<[1], [0], [0], [1], [0, 0, 1, 1], [], []>} : vector<8x32xbf16>, vector<32x128xbf16>, vector<8x128xf32> -> vector<8x128xf32>
    %141 = arith.addf %115, %140 : vector<8x128xf32>
    %c0_43 = arith.constant 0 : index
    %c0_44 = arith.constant 0 : index
    %142 = vector.load %arg6[%c0_43, %c0_44] : memref<1x128xf32, #tpu.memory_space<vmem>>, vector<1x128xf32>
    %143 = vector.broadcast %142 : vector<1x128xf32> to vector<8x128xf32>
    %144 = arith.addf %141, %143 : vector<8x128xf32>
    %c0_45 = arith.constant 0 : index
    %c0_46 = arith.constant 0 : index
    %c0_47 = arith.constant 0 : index
    %145 = vector.load %arg11[%c0_45, %c0_46, %c0_47] : memref<2x128x384xbf16, #tpu.memory_space<vmem>>, vector<1x128x384xbf16>
    %146 = vector.shape_cast %145 : vector<1x128x384xbf16> to vector<128x384xbf16>
    %c0_48 = arith.constant 0 : index
    %c0_49 = arith.constant 0 : index
    %c0_50 = arith.constant 0 : index
    %147 = vector.load %arg12[%c0_48, %c0_49, %c0_50] : memref<2x128x256xbf16, #tpu.memory_space<vmem>>, vector<1x128x256xbf16>
    %148 = vector.shape_cast %147 : vector<1x128x256xbf16> to vector<128x256xbf16>
    %c0_51 = arith.constant 0 : index
    %c0_52 = arith.constant 0 : index
    %c0_53 = arith.constant 0 : index
    %149 = vector.load %arg13[%c0_51, %c0_52, %c0_53] : memref<2x128x128xbf16, #tpu.memory_space<vmem>>, vector<1x128x128xbf16>
    %150 = vector.shape_cast %149 : vector<1x128x128xbf16> to vector<128x128xbf16>
    %c0_54 = arith.constant 0 : index
    %c0_55 = arith.constant 0 : index
    %151 = vector.load %arg14[%c0_54, %c0_55] : memref<2x256xf32, #tpu.memory_space<vmem>>, vector<1x256xf32>
    %152 = arith.truncf %144 : vector<8x128xf32> to vector<8x128xbf16>
    %cst_56 = arith.constant dense<0.000000e+00> : vector<8x384xf32>
    %153 = tpu.matmul %152, %146, %cst_56 {dimension_numbers = #tpu.dot_dimension_numbers<[1], [0], [0], [1], [0, 0, 1, 1], [], []>} : vector<8x128xbf16>, vector<128x384xbf16>, vector<8x384xf32> -> vector<8x384xf32>
    %154 = arith.truncf %0 : vector<8x128xf32> to vector<8x128xbf16>
    %cst_57 = arith.constant dense<0.000000e+00> : vector<8x256xf32>
    %155 = tpu.matmul %154, %148, %cst_57 {dimension_numbers = #tpu.dot_dimension_numbers<[1], [0], [0], [1], [0, 0, 1, 1], [], []>} : vector<8x128xbf16>, vector<128x256xbf16>, vector<8x256xf32> -> vector<8x256xf32>
    %156 = vector.extract_strided_slice %153 {offsets = [0, 0], sizes = [8, 256], strides = [1, 1]} : vector<8x384xf32> to vector<8x256xf32>
    %157 = arith.addf %156, %155 : vector<8x256xf32>
    %158 = vector.broadcast %151 : vector<1x256xf32> to vector<8x256xf32>
    %159 = arith.subf %157, %158 : vector<8x256xf32>
    %160 = arith.negf %159 : vector<8x256xf32>
    %161 = math.exp %160 : vector<8x256xf32>
    %cst_58 = arith.constant 1.000000e+00 : f32
    %162 = vector.broadcast %cst_58 : f32 to vector<8x256xf32>
    %163 = arith.addf %162, %161 : vector<8x256xf32>
    %164 = arith.divf %162, %163 : vector<8x256xf32>
    %165 = vector.extract_strided_slice %164 {offsets = [0, 0], sizes = [8, 128], strides = [1, 1]} : vector<8x256xf32> to vector<8x128xf32>
    %166 = vector.extract_strided_slice %164 {offsets = [0, 128], sizes = [8, 128], strides = [1, 1]} : vector<8x256xf32> to vector<8x128xf32>
    %167 = vector.extract_strided_slice %153 {offsets = [0, 256], sizes = [8, 128], strides = [1, 1]} : vector<8x384xf32> to vector<8x128xf32>
    %168 = arith.mulf %165, %0 : vector<8x128xf32>
    %169 = arith.truncf %168 : vector<8x128xf32> to vector<8x128xbf16>
    %cst_59 = arith.constant dense<0.000000e+00> : vector<8x128xf32>
    %170 = tpu.matmul %169, %150, %cst_59 {dimension_numbers = #tpu.dot_dimension_numbers<[1], [0], [0], [1], [0, 0, 1, 1], [], []>} : vector<8x128xbf16>, vector<128x128xbf16>, vector<8x128xf32> -> vector<8x128xf32>
    %171 = arith.addf %167, %170 : vector<8x128xf32>
    %172 = math.tanh %171 : vector<8x128xf32>
    %173 = arith.subf %172, %0 : vector<8x128xf32>
    %174 = arith.mulf %166, %173 : vector<8x128xf32>
    %175 = arith.addf %0, %174 : vector<8x128xf32>
    %c2 = arith.constant 2 : index
    %c0_60 = arith.constant 0 : index
    %176 = vector.load %arg2[%c2, %c0_60] : memref<4x128xf32, #tpu.memory_space<vmem>>, vector<1x128xf32>
    %c3 = arith.constant 3 : index
    %c0_61 = arith.constant 0 : index
    %177 = vector.load %arg2[%c3, %c0_61] : memref<4x128xf32, #tpu.memory_space<vmem>>, vector<1x128xf32>
    %cst_62 = arith.constant dense<0.000000e+00> : vector<8xf32>
    %178 = vector.multi_reduction <add>, %175, %cst_62 [1] : vector<8x128xf32> to vector<8xf32>
    %179 = vector.shape_cast %178 : vector<8xf32> to vector<8x1xf32>
    %cst_63 = arith.constant 3.125000e-02 : f32
    %180 = vector.broadcast %cst_63 : f32 to vector<8x1xf32>
    %181 = arith.mulf %179, %180 : vector<8x1xf32>
    %182 = vector.broadcast %181 : vector<8x1xf32> to vector<8x128xf32>
    %183 = arith.subf %175, %182 : vector<8x128xf32>
    %184 = vector.broadcast %5 : vector<1x128xf32> to vector<8x128xf32>
    %185 = arith.mulf %183, %184 : vector<8x128xf32>
    %186 = arith.mulf %185, %185 : vector<8x128xf32>
    %cst_64 = arith.constant dense<0.000000e+00> : vector<8xf32>
    %187 = vector.multi_reduction <add>, %186, %cst_64 [1] : vector<8x128xf32> to vector<8xf32>
    %188 = vector.shape_cast %187 : vector<8xf32> to vector<8x1xf32>
    %cst_65 = arith.constant 3.125000e-02 : f32
    %189 = vector.broadcast %cst_65 : f32 to vector<8x1xf32>
    %190 = arith.mulf %188, %189 : vector<8x1xf32>
    %cst_66 = arith.constant 9.99999974E-6 : f32
    %191 = vector.broadcast %cst_66 : f32 to vector<8x1xf32>
    %192 = arith.addf %190, %191 : vector<8x1xf32>
    %193 = math.rsqrt %192 : vector<8x1xf32>
    %194 = vector.broadcast %193 : vector<8x1xf32> to vector<8x128xf32>
    %195 = arith.mulf %185, %194 : vector<8x128xf32>
    %196 = vector.broadcast %176 : vector<1x128xf32> to vector<8x128xf32>
    %197 = arith.mulf %195, %196 : vector<8x128xf32>
    %198 = vector.broadcast %177 : vector<1x128xf32> to vector<8x128xf32>
    %199 = arith.addf %197, %198 : vector<8x128xf32>
    %200 = arith.truncf %199 : vector<8x128xf32> to vector<8x128xbf16>
    %c0_67 = arith.constant 0 : index
    %c0_68 = arith.constant 0 : index
    %201 = vector.load %arg7[%c0_67, %c0_68] : memref<128x128xbf16, #tpu.memory_space<vmem>>, vector<128x128xbf16>
    %cst_69 = arith.constant dense<0.000000e+00> : vector<8x128xf32>
    %202 = tpu.matmul %200, %201, %cst_69 {dimension_numbers = #tpu.dot_dimension_numbers<[1], [0], [0], [1], [0, 0, 1, 1], [], []>} : vector<8x128xbf16>, vector<128x128xbf16>, vector<8x128xf32> -> vector<8x128xf32>
    %c0_70 = arith.constant 0 : index
    %c0_71 = arith.constant 0 : index
    %203 = vector.load %arg8[%c0_70, %c0_71] : memref<1x128xf32, #tpu.memory_space<vmem>>, vector<1x128xf32>
    %204 = vector.broadcast %203 : vector<1x128xf32> to vector<8x128xf32>
    %205 = arith.addf %202, %204 : vector<8x128xf32>
    %cst_72 = arith.constant 0.000000e+00 : f32
    %206 = vector.broadcast %cst_72 : f32 to vector<8x128xf32>
    %207 = arith.maximumf %205, %206 : vector<8x128xf32>
    %208 = arith.truncf %207 : vector<8x128xf32> to vector<8x128xbf16>
    %c0_73 = arith.constant 0 : index
    %c0_74 = arith.constant 0 : index
    %209 = vector.load %arg9[%c0_73, %c0_74] : memref<128x128xbf16, #tpu.memory_space<vmem>>, vector<128x128xbf16>
    %cst_75 = arith.constant dense<0.000000e+00> : vector<8x128xf32>
    %210 = tpu.matmul %208, %209, %cst_75 {dimension_numbers = #tpu.dot_dimension_numbers<[1], [0], [0], [1], [0, 0, 1, 1], [], []>} : vector<8x128xbf16>, vector<128x128xbf16>, vector<8x128xf32> -> vector<8x128xf32>
    %c0_76 = arith.constant 0 : index
    %c0_77 = arith.constant 0 : index
    %211 = vector.load %arg10[%c0_76, %c0_77] : memref<1x128xf32, #tpu.memory_space<vmem>>, vector<1x128xf32>
    %212 = vector.broadcast %211 : vector<1x128xf32> to vector<8x128xf32>
    %213 = arith.addf %210, %212 : vector<8x128xf32>
    %c1_78 = arith.constant 1 : index
    %c0_79 = arith.constant 0 : index
    %c0_80 = arith.constant 0 : index
    %214 = vector.load %arg11[%c1_78, %c0_79, %c0_80] : memref<2x128x384xbf16, #tpu.memory_space<vmem>>, vector<1x128x384xbf16>
    %215 = vector.shape_cast %214 : vector<1x128x384xbf16> to vector<128x384xbf16>
    %c1_81 = arith.constant 1 : index
    %c0_82 = arith.constant 0 : index
    %c0_83 = arith.constant 0 : index
    %216 = vector.load %arg12[%c1_81, %c0_82, %c0_83] : memref<2x128x256xbf16, #tpu.memory_space<vmem>>, vector<1x128x256xbf16>
    %217 = vector.shape_cast %216 : vector<1x128x256xbf16> to vector<128x256xbf16>
    %c1_84 = arith.constant 1 : index
    %c0_85 = arith.constant 0 : index
    %c0_86 = arith.constant 0 : index
    %218 = vector.load %arg13[%c1_84, %c0_85, %c0_86] : memref<2x128x128xbf16, #tpu.memory_space<vmem>>, vector<1x128x128xbf16>
    %219 = vector.shape_cast %218 : vector<1x128x128xbf16> to vector<128x128xbf16>
    %c1_87 = arith.constant 1 : index
    %c0_88 = arith.constant 0 : index
    %220 = vector.load %arg14[%c1_87, %c0_88] : memref<2x256xf32, #tpu.memory_space<vmem>>, vector<1x256xf32>
    %221 = arith.truncf %213 : vector<8x128xf32> to vector<8x128xbf16>
    %cst_89 = arith.constant dense<0.000000e+00> : vector<8x384xf32>
    %222 = tpu.matmul %221, %215, %cst_89 {dimension_numbers = #tpu.dot_dimension_numbers<[1], [0], [0], [1], [0, 0, 1, 1], [], []>} : vector<8x128xbf16>, vector<128x384xbf16>, vector<8x384xf32> -> vector<8x384xf32>
    %223 = arith.truncf %175 : vector<8x128xf32> to vector<8x128xbf16>
    %cst_90 = arith.constant dense<0.000000e+00> : vector<8x256xf32>
    %224 = tpu.matmul %223, %217, %cst_90 {dimension_numbers = #tpu.dot_dimension_numbers<[1], [0], [0], [1], [0, 0, 1, 1], [], []>} : vector<8x128xbf16>, vector<128x256xbf16>, vector<8x256xf32> -> vector<8x256xf32>
    %225 = vector.extract_strided_slice %222 {offsets = [0, 0], sizes = [8, 256], strides = [1, 1]} : vector<8x384xf32> to vector<8x256xf32>
    %226 = arith.addf %225, %224 : vector<8x256xf32>
    %227 = vector.broadcast %220 : vector<1x256xf32> to vector<8x256xf32>
    %228 = arith.subf %226, %227 : vector<8x256xf32>
    %229 = arith.negf %228 : vector<8x256xf32>
    %230 = math.exp %229 : vector<8x256xf32>
    %cst_91 = arith.constant 1.000000e+00 : f32
    %231 = vector.broadcast %cst_91 : f32 to vector<8x256xf32>
    %232 = arith.addf %231, %230 : vector<8x256xf32>
    %233 = arith.divf %231, %232 : vector<8x256xf32>
    %234 = vector.extract_strided_slice %233 {offsets = [0, 0], sizes = [8, 128], strides = [1, 1]} : vector<8x256xf32> to vector<8x128xf32>
    %235 = vector.extract_strided_slice %233 {offsets = [0, 128], sizes = [8, 128], strides = [1, 1]} : vector<8x256xf32> to vector<8x128xf32>
    %236 = vector.extract_strided_slice %222 {offsets = [0, 256], sizes = [8, 128], strides = [1, 1]} : vector<8x384xf32> to vector<8x128xf32>
    %237 = arith.mulf %234, %175 : vector<8x128xf32>
    %238 = arith.truncf %237 : vector<8x128xf32> to vector<8x128xbf16>
    %cst_92 = arith.constant dense<0.000000e+00> : vector<8x128xf32>
    %239 = tpu.matmul %238, %219, %cst_92 {dimension_numbers = #tpu.dot_dimension_numbers<[1], [0], [0], [1], [0, 0, 1, 1], [], []>} : vector<8x128xbf16>, vector<128x128xbf16>, vector<8x128xf32> -> vector<8x128xf32>
    %240 = arith.addf %236, %239 : vector<8x128xf32>
    %241 = math.tanh %240 : vector<8x128xf32>
    %242 = arith.subf %241, %175 : vector<8x128xf32>
    %243 = arith.mulf %235, %242 : vector<8x128xf32>
    %244 = arith.addf %175, %243 : vector<8x128xf32>
    %c0_93 = arith.constant 0 : index
    %c0_94 = arith.constant 0 : index
    %245 = vector.load %arg15[%c0_93, %c0_94] : memref<8x128xf32, #tpu.memory_space<vmem>>, vector<8x128xf32>
    tpu.vector_store %arg15[%c0_93, %c0_94], %244 {strides = array<i32>} : memref<8x128xf32, #tpu.memory_space<vmem>>, vector<8x128xf32>,
    return
  }
  func.func @transform_0(%arg0: i32) -> (i32, i32) {
    %c0_i32 = arith.constant 0 : i32
    %c0_i32_0 = arith.constant 0 : i32
    return %arg0, %c0_i32 : i32, i32
  }
  func.func @transform_1(%arg0: i32) -> (i32, i32) {
    %c0_i32 = arith.constant 0 : i32
    %c0_i32_0 = arith.constant 0 : i32
    %c0_i32_1 = arith.constant 0 : i32
    return %c0_i32, %c0_i32_0 : i32, i32
  }
  func.func @transform_2(%arg0: i32) -> (i32, i32) {
    %c0_i32 = arith.constant 0 : i32
    %c0_i32_0 = arith.constant 0 : i32
    %c0_i32_1 = arith.constant 0 : i32
    return %c0_i32, %c0_i32_0 : i32, i32
  }
  func.func @transform_3(%arg0: i32) -> (i32, i32) {
    %c0_i32 = arith.constant 0 : i32
    %c0_i32_0 = arith.constant 0 : i32
    %c0_i32_1 = arith.constant 0 : i32
    return %c0_i32, %c0_i32_0 : i32, i32
  }
  func.func @transform_4(%arg0: i32) -> (i32, i32) {
    %c0_i32 = arith.constant 0 : i32
    %c0_i32_0 = arith.constant 0 : i32
    %c0_i32_1 = arith.constant 0 : i32
    return %c0_i32, %c0_i32_0 : i32, i32
  }
  func.func @transform_5(%arg0: i32) -> (i32, i32) {
    %c0_i32 = arith.constant 0 : i32
    %c0_i32_0 = arith.constant 0 : i32
    %c0_i32_1 = arith.constant 0 : i32
    return %c0_i32, %c0_i32_0 : i32, i32
  }
  func.func @transform_6(%arg0: i32) -> (i32, i32) {
    %c0_i32 = arith.constant 0 : i32
    %c0_i32_0 = arith.constant 0 : i32
    %c0_i32_1 = arith.constant 0 : i32
    return %c0_i32, %c0_i32_0 : i32, i32
  }
  func.func @transform_7(%arg0: i32) -> (i32, i32) {
    %c0_i32 = arith.constant 0 : i32
    %c0_i32_0 = arith.constant 0 : i32
    %c0_i32_1 = arith.constant 0 : i32
    return %c0_i32, %c0_i32_0 : i32, i32
  }
  func.func @transform_8(%arg0: i32) -> (i32, i32) {
    %c0_i32 = arith.constant 0 : i32
    %c0_i32_0 = arith.constant 0 : i32
    %c0_i32_1 = arith.constant 0 : i32
    return %c0_i32, %c0_i32_0 : i32, i32
  }
  func.func @transform_9(%arg0: i32) -> (i32, i32) {
    %c0_i32 = arith.constant 0 : i32
    %c0_i32_0 = arith.constant 0 : i32
    %c0_i32_1 = arith.constant 0 : i32
    return %c0_i32, %c0_i32_0 : i32, i32
  }
  func.func @transform_10(%arg0: i32) -> (i32, i32, i32) {
    %c0_i32 = arith.constant 0 : i32
    %c0_i32_0 = arith.constant 0 : i32
    %c0_i32_1 = arith.constant 0 : i32
    %c0_i32_2 = arith.constant 0 : i32
    return %c0_i32, %c0_i32_0, %c0_i32_1 : i32, i32, i32
  }
  func.func @transform_11(%arg0: i32) -> (i32, i32, i32) {
    %c0_i32 = arith.constant 0 : i32
    %c0_i32_0 = arith.constant 0 : i32
    %c0_i32_1 = arith.constant 0 : i32
    %c0_i32_2 = arith.constant 0 : i32
    return %c0_i32, %c0_i32_0, %c0_i32_1 : i32, i32, i32
  }
  func.func @transform_12(%arg0: i32) -> (i32, i32, i32) {
    %c0_i32 = arith.constant 0 : i32
    %c0_i32_0 = arith.constant 0 : i32
    %c0_i32_1 = arith.constant 0 : i32
    %c0_i32_2 = arith.constant 0 : i32
    return %c0_i32, %c0_i32_0, %c0_i32_1 : i32, i32, i32
  }
  func.func @transform_13(%arg0: i32) -> (i32, i32) {
    %c0_i32 = arith.constant 0 : i32
    %c0_i32_0 = arith.constant 0 : i32
    %c0_i32_1 = arith.constant 0 : i32
    return %c0_i32, %c0_i32_0 : i32, i32
  }
  func.func @transform_14(%arg0: i32) -> (i32, i32) {
    %c0_i32 = arith.constant 0 : i32
    %c0_i32_0 = arith.constant 0 : i32
    return %arg0, %c0_i32 : i32, i32
  }
}

</mosaic_0001>

<llo_original>
// kernel: tpu_custom_call.1
$region0: #{tpu_custom_call.1}
  #allocation0 [shape = 'u32[]', space=smem, size = 0x4, offset = 0x4, fixed_abs, tag = 'smem constant byte address 0x4 - core index']
  #allocation1 [shape = 'u32[72,128]{1,0:T(1,128)}', space=vmem, size = 0x9000, scoped, tag = 'internal scratch']
  %s0 = inlined_call_operand.hbm [shape: f32[16,128], index: 0, kind: input, shape index: {}]
  %s1 = inlined_call_operand.hbm [shape: f32[4,128], index: 1, kind: input, shape index: {}]
  %s2 = inlined_call_operand.hbm [shape: bf16[128,384], index: 2, kind: input, shape index: {}]
  %s3 = inlined_call_operand.hbm [shape: f32[1,384], index: 3, kind: input, shape index: {}]
  %s4 = inlined_call_operand.hbm [shape: bf16[128,128], index: 4, kind: input, shape index: {}]
  %s5 = inlined_call_operand.vmem [shape: f32[1,128], index: 5, kind: input, shape index: {}]
  %s6 = inlined_call_operand.hbm [shape: bf16[128,128], index: 6, kind: input, shape index: {}]
  %s7 = inlined_call_operand.vmem [shape: f32[1,128], index: 7, kind: input, shape index: {}]
  %s8 = inlined_call_operand.hbm [shape: bf16[128,128], index: 8, kind: input, shape index: {}]
  %s9 = inlined_call_operand.vmem [shape: f32[1,128], index: 9, kind: input, shape index: {}]
  %s10 = inlined_call_operand.hbm [shape: bf16[2,128,384], index: 10, kind: input, shape index: {}]
  %s11 = inlined_call_operand.hbm [shape: bf16[2,128,256], index: 11, kind: input, shape index: {}]
  %s12 = inlined_call_operand.hbm [shape: bf16[2,128,128], index: 12, kind: input, shape index: {}]
  %s13 = inlined_call_operand.vmem [shape: f32[2,256], index: 13, kind: input, shape index: {}]
  %s14 = inlined_call_operand.hbm [shape: f32[16,128], index: 14, kind: output, shape index: {}]
  %s15 = sld [smem:[#allocation0]]
  $region129: #{tpu_custom_call.1} parent=0
    _
  %s17 = ssub.s32 1, %s15
  %s18 = scalar_select 0, %s17, %s15
  $region1: #{tpu_custom_call.1} parent=0
    #allocation2 [shape = 'u8[8192]{0}', space=vmem, size = 0x2000, scoped, tag = 'input window, operand 0']
    #allocation3 [shape = 's32[2]{0}', space=sflag, size = 0x8, scoped, tag = 'scoped memory for tpu_custom_call.1']
    #allocation4 [shape = 's32[2]{0}', space=sflag, size = 0x8, scoped, tag = 'scoped memory for tpu_custom_call.1']
    #allocation5 [shape = 'u8[2048]{0}', space=vmem, size = 0x800, scoped, tag = 'input window, operand 1, single buffered']
    #allocation6 [shape = 's32[1]{0}', space=sflag, size = 0x4, scoped, tag = 'scoped memory for tpu_custom_call.1']
    #allocation7 [shape = 'u8[98304]{0}', space=vmem, size = 0x18000, scoped, tag = 'input window, operand 2, single buffered']
    #allocation8 [shape = 'u8[1536]{0}', space=vmem, size = 0x800, scoped, tag = 'input window, operand 3, single buffered']
    #allocation9 [shape = 's32[1]{0}', space=sflag, size = 0x4, scoped, tag = 'scoped memory for tpu_custom_call.1']
    #allocation10 [shape = 'u8[32768]{0}', space=vmem, size = 0x8000, scoped, tag = 'input window, operand 4, single buffered']
    #allocation11 [shape = 'u8[32768]{0}', space=vmem, size = 0x8000, scoped, tag = 'input window, operand 6, single buffered']
    #allocation12 [shape = 's32[1]{0}', space=sflag, size = 0x4, scoped, tag = 'scoped memory for tpu_custom_call.1']
    #allocation13 [shape = 'u8[32768]{0}', space=vmem, size = 0x8000, scoped, tag = 'input window, operand 8, single buffered']
    #allocation14 [shape = 'u8[196608]{0}', space=vmem, size = 0x30000, scoped, tag = 'input window, operand 10, single buffered']
    #allocation15 [shape = 's32[1]{0}', space=sflag, size = 0x4, scoped, tag = 'scoped memory for tpu_custom_call.1']
    #allocation16 [shape = 'u8[131072]{0}', space=vmem, size = 0x20000, scoped, tag = 'input window, operand 11, single buffered']
    #allocation17 [shape = 'u8[65536]{0}', space=vmem, size = 0x10000, scoped, tag = 'input window, operand 12, single buffered']
    #allocation18 [shape = 's32[1]{0}', space=sflag, size = 0x4, scoped, tag = 'scoped memory for tpu_custom_call.1']
    #allocation19 [shape = 'u8[8192]{0}', space=vmem, size = 0x2000, scoped, tag = 'output window, operand 0']
    %19 = vsyncpa [#allocation3], 0
    %s20 = scalar_lea.sflag [#allocation3], 1
    %21 = vsyncpa %s20, 0
    %22 = vsyncpa [#allocation6], 0
    %23 = vsyncpa [#allocation9], 0
    %24 = vsyncpa [#allocation12], 0
    %25 = vsyncpa [#allocation15], 0
    %26 = vsyncpa [#allocation18], 0
    %27 = vsyncpa [#allocation4], 0
    %s28 = scalar_lea.sflag [#allocation4], 1
    %29 = vsyncpa %s28, 0
    loop: start=0, step=1, limit=4
    $region2: #{tpu_custom_call.1} parent=1 // loop_pre_header
      _
    $region3: #{tpu_custom_call.1} parent=1 // loop_header
      %s31 = sphi 0, %s35
      %p32 = scmp.ge.s32.totalorder %s31, 4
      %s41 = sphi 0, %s43
      %s44 = sphi 0, %s41
      %s45 = sphi 0, %s44
      %s61 = sphi 0, %s45
      %s65 = sphi 0, %s65
      %s67 = sphi 0, %s65
      %s68 = sphi 0, %s67
      %s82 = sphi 0, %s68
      %s86 = sphi 0, %s86
      %s88 = sphi 0, %s86
      %s89 = sphi 0, %s88
      %s103 = sphi 0, %s89
      %s107 = sphi 0, %s107
      %s109 = sphi 0, %s107
      %s110 = sphi 0, %s109
      %s124 = sphi 0, %s110
      %s128 = sphi 0, %s128
      %s130 = sphi 0, %s128
      %s131 = sphi 0, %s130
      %s145 = sphi 0, %s131
      %s149 = sphi 0, %s149
      %s151 = sphi 0, %s149
      %s152 = sphi 0, %s151
      %s166 = sphi 0, %s152
      %s170 = sphi 0, %s170
      %s172 = sphi 0, %s170
      %s173 = sphi 0, %s172
      %s187 = sphi 0, %s173
      %s191 = sphi 0, %s191
      %s193 = sphi 0, %s191
      %s194 = sphi 0, %s193
      %s208 = sphi 0, %s194
      %s212 = sphi 0, %s212
      %s214 = sphi 0, %s212
      %s215 = sphi 0, %s214
      %s229 = sphi 0, %s215
      %s233 = sphi 0, %s233
      %s235 = sphi 0, %s233
      %s236 = sphi 0, %s235
      %s250 = sphi 0, %s236
      %s254 = sphi 0, %s254
      %s256 = sphi 0, %s254
      %s257 = sphi 0, %s256
      %s271 = sphi 0, %s257
      %s275 = sphi 0, %s275
      %s277 = sphi 0, %s275
      %s278 = sphi 0, %s277
      %s292 = sphi 0, %s278
      %s296 = sphi 0, %s296
      %s298 = sphi 0, %s296
      %s299 = sphi 0, %s298
      %s313 = sphi 0, %s299
      %s317 = sphi 0, %s317
      %s319 = sphi 0, %s317
      %s320 = sphi 0, %s319
      %s334 = sphi 0, %s320
      %s340 = sphi 0, %s342
      %s343 = sphi 0, %s340
      %s344 = sphi 0, %s343
      %s360 = sphi 0, %s344
    $region4: #{tpu_custom_call.1} parent=1 // loop_header_branch
      %34 = sbr.rel (%p32) target = $region8
    $region5: #{tpu_custom_call.1} parent=1 // loop_body
      %s36 = ssub.s32 %s31, 1
      %s37 = ssub.s32 %s31, 2
      %s38 = sadd.s32 %s31, 1
      %s39 = ssub.s32 %s31, %s38
      %p40 = scmp.eq.s32.totalorder %s39, 0
      %s42 = sadd.s32 %s41, 1
      %s43 = scalar_select %p40, %s41, %s42
      %p46 = pneg %p40
      %p47 = scmp.eq.s32.totalorder %s31, 1
      %p48 = por %p46, %p47
      %p49 = scmp.ne.s32.totalorder %s41, %s44
      %p50 = scmp.eq.s32.totalorder %s31, 0
      %p51 = por %p49, %p50
      %p52 = scmp.ne.s32.totalorder %s41, %s44
      %p53 = scmp.eq.s32.totalorder %s36, 1
      %p54 = por %p52, %p53
      %p55 = scmp.ne.s32.totalorder %s44, %s45
      %p56 = scmp.eq.s32.totalorder %s36, 0
      %p57 = por %p55, %p56
      %p58 = scmp.ne.s32.totalorder %s44, %s45
      %p59 = scmp.eq.s32.totalorder %s37, 1
      %p60 = por %p58, %p59
      %p62 = scmp.ne.s32.totalorder %s45, %s61
      %p63 = scmp.eq.s32.totalorder %s37, 0
      %p64 = por %p62, %p63
      %s66 = sadd.s32 %s65, 1
      %p69 = scmp.eq.s32.totalorder %s31, 1
      %p70 = scmp.ne.s32.totalorder %s65, %s67
      %p71 = scmp.eq.s32.totalorder %s31, 0
      %p72 = por %p70, %p71
      %p73 = scmp.ne.s32.totalorder %s65, %s67
      %p74 = scmp.eq.s32.totalorder %s36, 1
      %p75 = por %p73, %p74
      %p76 = scmp.ne.s32.totalorder %s67, %s68
      %p77 = scmp.eq.s32.totalorder %s36, 0
      %p78 = por %p76, %p77
      %p79 = scmp.ne.s32.totalorder %s67, %s68
      %p80 = scmp.eq.s32.totalorder %s37, 1
      %p81 = por %p79, %p80
      %p83 = scmp.ne.s32.totalorder %s68, %s82
      %p84 = scmp.eq.s32.totalorder %s37, 0
      %p85 = por %p83, %p84
      %s87 = sadd.s32 %s86, 1
      %p90 = scmp.eq.s32.totalorder %s31, 1
      %p91 = scmp.ne.s32.totalorder %s86, %s88
      %p92 = scmp.eq.s32.totalorder %s31, 0
      %p93 = por %p91, %p92
      %p94 = scmp.ne.s32.totalorder %s86, %s88
      %p95 = scmp.eq.s32.totalorder %s36, 1
      %p96 = por %p94, %p95
      %p97 = scmp.ne.s32.totalorder %s88, %s89
      %p98 = scmp.eq.s32.totalorder %s36, 0
      %p99 = por %p97, %p98
      %p100 = scmp.ne.s32.totalorder %s88, %s89
      %p101 = scmp.eq.s32.totalorder %s37, 1
      %p102 = por %p100, %p101
      %p104 = scmp.ne.s32.totalorder %s89, %s103
      %p105 = scmp.eq.s32.totalorder %s37, 0
      %p106 = por %p104, %p105
      %s108 = sadd.s32 %s107, 1
      %p111 = scmp.eq.s32.totalorder %s31, 1
      %p112 = scmp.ne.s32.totalorder %s107, %s109
      %p113 = scmp.eq.s32.totalorder %s31, 0
      %p114 = por %p112, %p113
      %p115 = scmp.ne.s32.totalorder %s107, %s109
      %p116 = scmp.eq.s32.totalorder %s36, 1
      %p117 = por %p115, %p116
      %p118 = scmp.ne.s32.totalorder %s109, %s110
      %p119 = scmp.eq.s32.totalorder %s36, 0
      %p120 = por %p118, %p119
      %p121 = scmp.ne.s32.totalorder %s109, %s110
      %p122 = scmp.eq.s32.totalorder %s37, 1
      %p123 = por %p121, %p122
      %p125 = scmp.ne.s32.totalorder %s110, %s124
      %p126 = scmp.eq.s32.totalorder %s37, 0
      %p127 = por %p125, %p126
      %s129 = sadd.s32 %s128, 1
      %p132 = scmp.eq.s32.totalorder %s31, 1
      %p133 = scmp.ne.s32.totalorder %s128, %s130
      %p134 = scmp.eq.s32.totalorder %s31, 0
      %p135 = por %p133, %p134
      %p136 = scmp.ne.s32.totalorder %s128, %s130
      %p137 = scmp.eq.s32.totalorder %s36, 1
      %p138 = por %p136, %p137
      %p139 = scmp.ne.s32.totalorder %s130, %s131
      %p140 = scmp.eq.s32.totalorder %s36, 0
      %p141 = por %p139, %p140
      %p142 = scmp.ne.s32.totalorder %s130, %s131
      %p143 = scmp.eq.s32.totalorder %s37, 1
      %p144 = por %p142, %p143
      %p146 = scmp.ne.s32.totalorder %s131, %s145
      %p147 = scmp.eq.s32.totalorder %s37, 0
      %p148 = por %p146, %p147
      %s150 = sadd.s32 %s149, 1
      %p153 = scmp.eq.s32.totalorder %s31, 1
      %p154 = scmp.ne.s32.totalorder %s149, %s151
      %p155 = scmp.eq.s32.totalorder %s31, 0
      %p156 = por %p154, %p155
      %p157 = scmp.ne.s32.totalorder %s149, %s151
      %p158 = scmp.eq.s32.totalorder %s36, 1
      %p159 = por %p157, %p158
      %p160 = scmp.ne.s32.totalorder %s151, %s152
      %p161 = scmp.eq.s32.totalorder %s36, 0
      %p162 = por %p160, %p161
      %p163 = scmp.ne.s32.totalorder %s151, %s152
      %p164 = scmp.eq.s32.totalorder %s37, 1
      %p165 = por %p163, %p164
      %p167 = scmp.ne.s32.totalorder %s152, %s166
      %p168 = scmp.eq.s32.totalorder %s37, 0
      %p169 = por %p167, %p168
      %s171 = sadd.s32 %s170, 1
      %p174 = scmp.eq.s32.totalorder %s31, 1
      %p175 = scmp.ne.s32.totalorder %s170, %s172
      %p176 = scmp.eq.s32.totalorder %s31, 0
      %p177 = por %p175, %p176
      %p178 = scmp.ne.s32.totalorder %s170, %s172
      %p179 = scmp.eq.s32.totalorder %s36, 1
      %p180 = por %p178, %p179
      %p181 = scmp.ne.s32.totalorder %s172, %s173
      %p182 = scmp.eq.s32.totalorder %s36, 0
      %p183 = por %p181, %p182
      %p184 = scmp.ne.s32.totalorder %s172, %s173
      %p185 = scmp.eq.s32.totalorder %s37, 1
      %p186 = por %p184, %p185
      %p188 = scmp.ne.s32.totalorder %s173, %s187
      %p189 = scmp.eq.s32.totalorder %s37, 0
      %p190 = por %p188, %p189
      %s192 = sadd.s32 %s191, 1
      %p195 = scmp.eq.s32.totalorder %s31, 1
      %p196 = scmp.ne.s32.totalorder %s191, %s193
      %p197 = scmp.eq.s32.totalorder %s31, 0
      %p198 = por %p196, %p197
      %p199 = scmp.ne.s32.totalorder %s191, %s193
      %p200 = scmp.eq.s32.totalorder %s36, 1
      %p201 = por %p199, %p200
      %p202 = scmp.ne.s32.totalorder %s193, %s194
      %p203 = scmp.eq.s32.totalorder %s36, 0
      %p204 = por %p202, %p203
      %p205 = scmp.ne.s32.totalorder %s193, %s194
      %p206 = scmp.eq.s32.totalorder %s37, 1
      %p207 = por %p205, %p206
      %p209 = scmp.ne.s32.totalorder %s194, %s208
      %p210 = scmp.eq.s32.totalorder %s37, 0
      %p211 = por %p209, %p210
      %s213 = sadd.s32 %s212, 1
      %p216 = scmp.eq.s32.totalorder %s31, 1
      %p217 = scmp.ne.s32.totalorder %s212, %s214
      %p218 = scmp.eq.s32.totalorder %s31, 0
      %p219 = por %p217, %p218
      %p220 = scmp.ne.s32.totalorder %s212, %s214
      %p221 = scmp.eq.s32.totalorder %s36, 1
      %p222 = por %p220, %p221
      %p223 = scmp.ne.s32.totalorder %s214, %s215
      %p224 = scmp.eq.s32.totalorder %s36, 0
      %p225 = por %p223, %p224
      %p226 = scmp.ne.s32.totalorder %s214, %s215
      %p227 = scmp.eq.s32.totalorder %s37, 1
      %p228 = por %p226, %p227
      %p230 = scmp.ne.s32.totalorder %s215, %s229
      %p231 = scmp.eq.s32.totalorder %s37, 0
      %p232 = por %p230, %p231
      %s234 = sadd.s32 %s233, 1
      %p237 = scmp.eq.s32.totalorder %s31, 1
      %p238 = scmp.ne.s32.totalorder %s233, %s235
      %p239 = scmp.eq.s32.totalorder %s31, 0
      %p240 = por %p238, %p239
      %p241 = scmp.ne.s32.totalorder %s233, %s235
      %p242 = scmp.eq.s32.totalorder %s36, 1
      %p243 = por %p241, %p242
      %p244 = scmp.ne.s32.totalorder %s235, %s236
      %p245 = scmp.eq.s32.totalorder %s36, 0
      %p246 = por %p244, %p245
      %p247 = scmp.ne.s32.totalorder %s235, %s236
      %p248 = scmp.eq.s32.totalorder %s37, 1
      %p249 = por %p247, %p248
      %p251 = scmp.ne.s32.totalorder %s236, %s250
      %p252 = scmp.eq.s32.totalorder %s37, 0
      %p253 = por %p251, %p252
      %s255 = sadd.s32 %s254, 1
      %p258 = scmp.eq.s32.totalorder %s31, 1
      %p259 = scmp.ne.s32.totalorder %s254, %s256
      %p260 = scmp.eq.s32.totalorder %s31, 0
      %p261 = por %p259, %p260
      %p262 = scmp.ne.s32.totalorder %s254, %s256
      %p263 = scmp.eq.s32.totalorder %s36, 1
      %p264 = por %p262, %p263
      %p265 = scmp.ne.s32.totalorder %s256, %s257
      %p266 = scmp.eq.s32.totalorder %s36, 0
      %p267 = por %p265, %p266
      %p268 = scmp.ne.s32.totalorder %s256, %s257
      %p269 = scmp.eq.s32.totalorder %s37, 1
      %p270 = por %p268, %p269
      %p272 = scmp.ne.s32.totalorder %s257, %s271
      %p273 = scmp.eq.s32.totalorder %s37, 0
      %p274 = por %p272, %p273
      %s276 = sadd.s32 %s275, 1
      %p279 = scmp.eq.s32.totalorder %s31, 1
      %p280 = scmp.ne.s32.totalorder %s275, %s277
      %p281 = scmp.eq.s32.totalorder %s31, 0
      %p282 = por %p280, %p281
      %p283 = scmp.ne.s32.totalorder %s275, %s277
      %p284 = scmp.eq.s32.totalorder %s36, 1
      %p285 = por %p283, %p284
      %p286 = scmp.ne.s32.totalorder %s277, %s278
      %p287 = scmp.eq.s32.totalorder %s36, 0
      %p288 = por %p286, %p287
      %p289 = scmp.ne.s32.totalorder %s277, %s278
      %p290 = scmp.eq.s32.totalorder %s37, 1
      %p291 = por %p289, %p290
      %p293 = scmp.ne.s32.totalorder %s278, %s292
      %p294 = scmp.eq.s32.totalorder %s37, 0
      %p295 = por %p293, %p294
      %s297 = sadd.s32 %s296, 1
      %p300 = scmp.eq.s32.totalorder %s31, 1
      %p301 = scmp.ne.s32.totalorder %s296, %s298
      %p302 = scmp.eq.s32.totalorder %s31, 0
      %p303 = por %p301, %p302
      %p304 = scmp.ne.s32.totalorder %s296, %s298
      %p305 = scmp.eq.s32.totalorder %s36, 1
      %p306 = por %p304, %p305
      %p307 = scmp.ne.s32.totalorder %s298, %s299
      %p308 = scmp.eq.s32.totalorder %s36, 0
      %p309 = por %p307, %p308
      %p310 = scmp.ne.s32.totalorder %s298, %s299
      %p311 = scmp.eq.s32.totalorder %s37, 1
      %p312 = por %p310, %p311
      %p314 = scmp.ne.s32.totalorder %s299, %s313
      %p315 = scmp.eq.s32.totalorder %s37, 0
      %p316 = por %p314, %p315
      %s318 = sadd.s32 %s317, 1
      %p321 = scmp.eq.s32.totalorder %s31, 1
      %p322 = scmp.ne.s32.totalorder %s317, %s319
      %p323 = scmp.eq.s32.totalorder %s31, 0
      %p324 = por %p322, %p323
      %p325 = scmp.ne.s32.totalorder %s317, %s319
      %p326 = scmp.eq.s32.totalorder %s36, 1
      %p327 = por %p325, %p326
      %p328 = scmp.ne.s32.totalorder %s319, %s320
      %p329 = scmp.eq.s32.totalorder %s36, 0
      %p330 = por %p328, %p329
      %p331 = scmp.ne.s32.totalorder %s319, %s320
      %p332 = scmp.eq.s32.totalorder %s37, 1
      %p333 = por %p331, %p332
      %p335 = scmp.ne.s32.totalorder %s320, %s334
      %p336 = scmp.eq.s32.totalorder %s37, 0
      %p337 = por %p335, %p336
      %s338 = ssub.s32 %s31, %s38
      %p339 = scmp.eq.s32.totalorder %s338, 0
      %s341 = sadd.s32 %s340, 1
      %s342 = scalar_select %p339, %s340, %s341
      %p345 = pneg %p339
      %p346 = scmp.eq.s32.totalorder %s31, 1
      %p347 = por %p345, %p346
      %p348 = scmp.ne.s32.totalorder %s340, %s343
      %p349 = scmp.eq.s32.totalorder %s31, 0
      %p350 = por %p348, %p349
      %p351 = scmp.ne.s32.totalorder %s340, %s343
      %p352 = scmp.eq.s32.totalorder %s36, 1
      %p353 = por %p351, %p352
      %p354 = scmp.ne.s32.totalorder %s343, %s344
      %p355 = scmp.eq.s32.totalorder %s36, 0
      %p356 = por %p354, %p355
      %p357 = scmp.ne.s32.totalorder %s343, %s344
      %p358 = scmp.eq.s32.totalorder %s37, 1
      %p359 = por %p357, %p358
      %p361 = scmp.ne.s32.totalorder %s344, %s360
      %p362 = scmp.eq.s32.totalorder %s37, 0
      %p363 = por %p361, %p362
      %p364 = scmp.le.s32.totalorder 1, %s31
      %p365 = scmp.lt.s32.totalorder %s31, 3
      %p366 = pnand %p364, %p365
      %p367 = pneg %p366
      // Predicated region
      $region9: #{tpu_custom_call.1} parent=5 // pred_check
        _
      $region10: #{tpu_custom_call.1} parent=5 // pred_check_branch
        %369 = sbr.rel (%p366) target = $region12
      $region11: #{tpu_custom_call.1} parent=5 // pred_region
        %s370 = ssub.s32 %s31, 1
        // Predicated region
        $region13: #{tpu_custom_call.1} parent=11 // pred_check
          %p371 = pneg %p78
        $region14: #{tpu_custom_call.1} parent=11 // pred_check_branch
          %373 = sbr.rel (%p371) target = $region16
        $region15: #{tpu_custom_call.1} parent=11 // pred_region
          %375 = vsyncadd [#allocation6], 0
          %s377 = sshll.u32 %s1, 4
          %s378 = int_to_ptr.hbm [resolvable:$true] %s377
          %s379 = sshll.u32 [#allocation5], 4
          %s380 = int_to_ptr.vmem [resolvable:$true] %s379
          %382 = dma.hbm_to_vmem [thread:$0]  %s378, 64, %s380, [#allocation6]
        $region16: #{tpu_custom_call.1} parent=11 // pred_fallthru
          _
        // Predicated region
        $region17: #{tpu_custom_call.1} parent=11 // pred_check
          %p383 = pneg %p99
        $region18: #{tpu_custom_call.1} parent=11 // pred_check_branch
          %385 = sbr.rel (%p383) target = $region20
        $region19: #{tpu_custom_call.1} parent=11 // pred_region
          %387 = vsyncadd [#allocation6], 0
          %s388 = sshll.u32 %s2, 4
          %s389 = int_to_ptr.hbm [resolvable:$true] %s388
          %s390 = sshll.u32 [#allocation7], 4
          %s391 = int_to_ptr.vmem [resolvable:$true] %s390
          %396 = dma.hbm_to_vmem [thread:$0]  %s389, 3072, %s391, [#allocation6], 192, 192, 12
        $region20: #{tpu_custom_call.1} parent=11 // pred_fallthru
          _
        // Predicated region
        $region21: #{tpu_custom_call.1} parent=11 // pred_check
          %p397 = pneg %p120
        $region22: #{tpu_custom_call.1} parent=11 // pred_check_branch
          %399 = sbr.rel (%p397) target = $region24
        $region23: #{tpu_custom_call.1} parent=11 // pred_region
          %401 = vsyncadd [#allocation9], 0
          %s403 = sshll.u32 %s3, 4
          %s404 = int_to_ptr.hbm [resolvable:$true] %s403
          %s405 = sshll.u32 [#allocation8], 4
          %s406 = int_to_ptr.vmem [resolvable:$true] %s405
          %408 = dma.hbm_to_vmem [thread:$0]  %s404, 48, %s406, [#allocation9]
        $region24: #{tpu_custom_call.1} parent=11 // pred_fallthru
          _
        // Predicated region
        $region25: #{tpu_custom_call.1} parent=11 // pred_check
          %p409 = pneg %p141
        $region26: #{tpu_custom_call.1} parent=11 // pred_check_branch
          %411 = sbr.rel (%p409) target = $region28
        $region27: #{tpu_custom_call.1} parent=11 // pred_region
          %413 = vsyncadd [#allocation9], 0
          %s414 = sshll.u32 %s4, 4
          %s415 = int_to_ptr.hbm [resolvable:$true] %s414
          %s416 = sshll.u32 [#allocation10], 4
          %s417 = int_to_ptr.vmem [resolvable:$true] %s416
          %422 = dma.hbm_to_vmem [thread:$0]  %s415, 1024, %s417, [#allocation9], 64, 64, 4
        $region28: #{tpu_custom_call.1} parent=11 // pred_fallthru
          _
        // Predicated region
        $region29: #{tpu_custom_call.1} parent=11 // pred_check
          %p423 = pneg %p162
        $region30: #{tpu_custom_call.1} parent=11 // pred_check_branch
          %425 = sbr.rel (%p423) target = $region32
        $region31: #{tpu_custom_call.1} parent=11 // pred_region
          _
        $region32: #{tpu_custom_call.1} parent=11 // pred_fallthru
          _
        // Predicated region
        $region33: #{tpu_custom_call.1} parent=11 // pred_check
          %p426 = pneg %p183
        $region34: #{tpu_custom_call.1} parent=11 // pred_check_branch
          %428 = sbr.rel (%p426) target = $region36
        $region35: #{tpu_custom_call.1} parent=11 // pred_region
          %430 = vsyncadd [#allocation12], 0
          %s431 = sshll.u32 %s6, 4
          %s432 = int_to_ptr.hbm [resolvable:$true] %s431
          %s433 = sshll.u32 [#allocation11], 4
          %s434 = int_to_ptr.vmem [resolvable:$true] %s433
          %439 = dma.hbm_to_vmem [thread:$0]  %s432, 1024, %s434, [#allocation12], 64, 64, 4
        $region36: #{tpu_custom_call.1} parent=11 // pred_fallthru
          _
        // Predicated region
        $region37: #{tpu_custom_call.1} parent=11 // pred_check
          %p440 = pneg %p204
        $region38: #{tpu_custom_call.1} parent=11 // pred_check_branch
          %442 = sbr.rel (%p440) target = $region40
        $region39: #{tpu_custom_call.1} parent=11 // pred_region
          _
        $region40: #{tpu_custom_call.1} parent=11 // pred_fallthru
          _
        // Predicated region
        $region41: #{tpu_custom_call.1} parent=11 // pred_check
          %p443 = pneg %p225
        $region42: #{tpu_custom_call.1} parent=11 // pred_check_branch
          %445 = sbr.rel (%p443) target = $region44
        $region43: #{tpu_custom_call.1} parent=11 // pred_region
          %447 = vsyncadd [#allocation12], 0
          %s448 = sshll.u32 %s8, 4
          %s449 = int_to_ptr.hbm [resolvable:$true] %s448
          %s450 = sshll.u32 [#allocation13], 4
          %s451 = int_to_ptr.vmem [resolvable:$true] %s450
          %456 = dma.hbm_to_vmem [thread:$0]  %s449, 1024, %s451, [#allocation12], 64, 64, 4
        $region44: #{tpu_custom_call.1} parent=11 // pred_fallthru
          _
        // Predicated region
        $region45: #{tpu_custom_call.1} parent=11 // pred_check
          %p457 = pneg %p246
        $region46: #{tpu_custom_call.1} parent=11 // pred_check_branch
          %459 = sbr.rel (%p457) target = $region48
        $region47: #{tpu_custom_call.1} parent=11 // pred_region
          _
        $region48: #{tpu_custom_call.1} parent=11 // pred_fallthru
          _
        // Predicated region
        $region49: #{tpu_custom_call.1} parent=11 // pred_check
          %p460 = pneg %p267
        $region50: #{tpu_custom_call.1} parent=11 // pred_check_branch
          %462 = sbr.rel (%p460) target = $region52
        $region51: #{tpu_custom_call.1} parent=11 // pred_region
          %464 = vsyncadd [#allocation15], 0
          %s465 = sshll.u32 %s10, 4
          %s466 = int_to_ptr.hbm [resolvable:$true] %s465
          %s467 = sshll.u32 [#allocation14], 4
          %s468 = int_to_ptr.vmem [resolvable:$true] %s467
          %473 = dma.hbm_to_vmem [thread:$0]  %s466, 6144, %s468, [#allocation15], 192, 192, 12
        $region52: #{tpu_custom_call.1} parent=11 // pred_fallthru
          _
        // Predicated region
        $region53: #{tpu_custom_call.1} parent=11 // pred_check
          %p474 = pneg %p288
        $region54: #{tpu_custom_call.1} parent=11 // pred_check_branch
          %476 = sbr.rel (%p474) target = $region56
        $region55: #{tpu_custom_call.1} parent=11 // pred_region
          %478 = vsyncadd [#allocation15], 0
          %s479 = sshll.u32 %s11, 4
          %s480 = int_to_ptr.hbm [resolvable:$true] %s479
          %s481 = sshll.u32 [#allocation16], 4
          %s482 = int_to_ptr.vmem [resolvable:$true] %s481
          %487 = dma.hbm_to_vmem [thread:$0]  %s480, 4096, %s482, [#allocation15], 128, 128, 8
        $region56: #{tpu_custom_call.1} parent=11 // pred_fallthru
          _
        // Predicated region
        $region57: #{tpu_custom_call.1} parent=11 // pred_check
          %p488 = pneg %p309
        $region58: #{tpu_custom_call.1} parent=11 // pred_check_branch
          %490 = sbr.rel (%p488) target = $region60
        $region59: #{tpu_custom_call.1} parent=11 // pred_region
          %492 = vsyncadd [#allocation18], 0
          %s493 = sshll.u32 %s12, 4
          %s494 = int_to_ptr.hbm [resolvable:$true] %s493
          %s495 = sshll.u32 [#allocation17], 4
          %s496 = int_to_ptr.vmem [resolvable:$true] %s495
          %501 = dma.hbm_to_vmem [thread:$0]  %s494, 2048, %s496, [#allocation18], 64, 64, 4
        $region60: #{tpu_custom_call.1} parent=11 // pred_fallthru
          _
        // Predicated region
        $region61: #{tpu_custom_call.1} parent=11 // pred_check
          %p502 = pneg %p330
        $region62: #{tpu_custom_call.1} parent=11 // pred_check_branch
          %504 = sbr.rel (%p502) target = $region64
        $region63: #{tpu_custom_call.1} parent=11 // pred_region
          _
        $region64: #{tpu_custom_call.1} parent=11 // pred_fallthru
          _
      $region12: #{tpu_custom_call.1} parent=5 // pred_fallthru
        _
      %p505 = scmp.lt.s32.totalorder %s31, 2
      // Predicated region
      $region65: #{tpu_custom_call.1} parent=5 // pred_check
        %p506 = pneg %p505
      $region66: #{tpu_custom_call.1} parent=5 // pred_check_branch
        %508 = sbr.rel (%p506) target = $region68
      $region67: #{tpu_custom_call.1} parent=5 // pred_region
        // Predicated region
        $region69: #{tpu_custom_call.1} parent=67 // pred_check
          %p509 = pneg %p51
        $region70: #{tpu_custom_call.1} parent=67 // pred_check_branch
          %511 = sbr.rel (%p509) target = $region72
        $region71: #{tpu_custom_call.1} parent=67 // pred_region
          %s512 = sand.u32 %s41, 1
          %s513 = scalar_lea.sflag [#allocation3], %s512
          %s514 = sand.u32 %s41, 1
          %s515 = smul.addr %s514, 8
          %s516 = scalar_lea.vmem [#allocation2], %s515
          %518 = vsyncadd %s513, 0
          %s519 = smul.addr %s31, 8
          %s520 = scalar_lea.hbm %s0, %s519
          %s522 = sshll.u32 %s520, 4
          %s523 = int_to_ptr.hbm [resolvable:$true] %s522
          %s524 = sshll.u32 %s516, 4
          %s525 = int_to_ptr.vmem [resolvable:$true] %s524
          %527 = dma.hbm_to_vmem [thread:$0]  %s523, 128, %s525, %s513
        $region72: #{tpu_custom_call.1} parent=67 // pred_fallthru
          _
      $region68: #{tpu_custom_call.1} parent=5 // pred_fallthru
        _
      %p528 = scmp.le.s32.totalorder 1, %s31
      %p529 = scmp.lt.s32.totalorder %s31, 3
      %p530 = pnand %p528, %p529
      %p531 = pneg %p530
      // Predicated region
      $region73: #{tpu_custom_call.1} parent=5 // pred_check
        _
      $region74: #{tpu_custom_call.1} parent=5 // pred_check_branch
        %533 = sbr.rel (%p530) target = $region76
      $region75: #{tpu_custom_call.1} parent=5 // pred_region
        %s534 = ssub.s32 %s31, 1
        %s535 = sand.u32 %s44, 1
        %s536 = scalar_lea.sflag [#allocation3], %s535
        %s537 = sand.u32 %s44, 1
        %s538 = smul.addr %s537, 8
        %s539 = scalar_lea.vmem [#allocation2], %s538
        // Predicated region
        $region77: #{tpu_custom_call.1} parent=75 // pred_check
          %p540 = pneg %p57
        $region78: #{tpu_custom_call.1} parent=75 // pred_check_branch
          %542 = sbr.rel (%p540) target = $region80
        $region79: #{tpu_custom_call.1} parent=75 // pred_region
          %544 = dma.done %s536, 128
        $region80: #{tpu_custom_call.1} parent=75 // pred_fallthru
          _
        // Predicated region
        $region81: #{tpu_custom_call.1} parent=75 // pred_check
          %p545 = pneg %p78
        $region82: #{tpu_custom_call.1} parent=75 // pred_check_branch
          %547 = sbr.rel (%p545) target = $region84
        $region83: #{tpu_custom_call.1} parent=75 // pred_region
          %549 = dma.done [#allocation6], 64
        $region84: #{tpu_custom_call.1} parent=75 // pred_fallthru
          _
        // Predicated region
        $region85: #{tpu_custom_call.1} parent=75 // pred_check
          %p550 = pneg %p99
        $region86: #{tpu_custom_call.1} parent=75 // pred_check_branch
          %552 = sbr.rel (%p550) target = $region88
        $region87: #{tpu_custom_call.1} parent=75 // pred_region
          %554 = dma.done [#allocation6], 3072
        $region88: #{tpu_custom_call.1} parent=75 // pred_fallthru
          _
        // Predicated region
        $region89: #{tpu_custom_call.1} parent=75 // pred_check
          %p555 = pneg %p120
        $region90: #{tpu_custom_call.1} parent=75 // pred_check_branch
          %557 = sbr.rel (%p555) target = $region92
        $region91: #{tpu_custom_call.1} parent=75 // pred_region
          %559 = dma.done [#allocation9], 48
        $region92: #{tpu_custom_call.1} parent=75 // pred_fallthru
          _
        // Predicated region
        $region93: #{tpu_custom_call.1} parent=75 // pred_check
          %p560 = pneg %p141
        $region94: #{tpu_custom_call.1} parent=75 // pred_check_branch
          %562 = sbr.rel (%p560) target = $region96
        $region95: #{tpu_custom_call.1} parent=75 // pred_region
          %564 = dma.done [#allocation9], 1024
        $region96: #{tpu_custom_call.1} parent=75 // pred_fallthru
          _
        // Predicated region
        $region97: #{tpu_custom_call.1} parent=75 // pred_check
          %p565 = pneg %p183
        $region98: #{tpu_custom_call.1} parent=75 // pred_check_branch
          %567 = sbr.rel (%p565) target = $region100
        $region99: #{tpu_custom_call.1} parent=75 // pred_region
          %569 = dma.done [#allocation12], 1024
        $region100: #{tpu_custom_call.1} parent=75 // pred_fallthru
          _
        // Predicated region
        $region101: #{tpu_custom_call.1} parent=75 // pred_check
          %p570 = pneg %p225
        $region102: #{tpu_custom_call.1} parent=75 // pred_check_branch
          %572 = sbr.rel (%p570) target = $region104
        $region103: #{tpu_custom_call.1} parent=75 // pred_region
          %574 = dma.done [#allocation12], 1024
        $region104: #{tpu_custom_call.1} parent=75 // pred_fallthru
          _
        // Predicated region
        $region105: #{tpu_custom_call.1} parent=75 // pred_check
          %p575 = pneg %p267
        $region106: #{tpu_custom_call.1} parent=75 // pred_check_branch
          %577 = sbr.rel (%p575) target = $region108
        $region107: #{tpu_custom_call.1} parent=75 // pred_region
          %579 = dma.done [#allocation15], 6144
        $region108: #{tpu_custom_call.1} parent=75 // pred_fallthru
          _
        // Predicated region
        $region109: #{tpu_custom_call.1} parent=75 // pred_check
          %p580 = pneg %p288
        $region110: #{tpu_custom_call.1} parent=75 // pred_check_branch
          %582 = sbr.rel (%p580) target = $region112
        $region111: #{tpu_custom_call.1} parent=75 // pred_region
          %584 = dma.done [#allocation15], 4096
        $region112: #{tpu_custom_call.1} parent=75 // pred_fallthru
          _
        // Predicated region
        $region113: #{tpu_custom_call.1} parent=75 // pred_check
          %p585 = pneg %p309
        $region114: #{tpu_custom_call.1} parent=75 // pred_check_branch
          %587 = sbr.rel (%p585) target = $region116
        $region115: #{tpu_custom_call.1} parent=75 // pred_region
          %589 = dma.done [#allocation18], 2048
        $region116: #{tpu_custom_call.1} parent=75 // pred_fallthru
          _
        %s590 = sand.u32 %s44, 1
        %s591 = scalar_lea.sflag [#allocation3], %s590
        %s592 = sand.u32 %s44, 1
        %s593 = smul.addr %s592, 8
        %s594 = scalar_lea.vmem [#allocation2], %s593
        %p595 = pneg %p57
        %p596 = pneg %p54
        %p597 = pneg %p78
        %p598 = pneg %p75
        %p599 = pneg %p99
        %p600 = pneg %p96
        %p601 = pneg %p120
        %p602 = pneg %p117
        %p603 = pneg %p141
        %p604 = pneg %p138
        %p605 = pneg %p162
        %p606 = pneg %p159
        %p607 = pneg %p183
        %p608 = pneg %p180
        %p609 = pneg %p204
        %p610 = pneg %p201
        %p611 = pneg %p225
        %p612 = pneg %p222
        %p613 = pneg %p246
        %p614 = pneg %p243
        %p615 = pneg %p267
        %p616 = pneg %p264
        %p617 = pneg %p288
        %p618 = pneg %p285
        %p619 = pneg %p309
        %p620 = pneg %p306
        %p621 = pneg %p330
        %p622 = pneg %p327
        %p623 = pneg %p356
        %p624 = pneg %p353
        %s625 = sand.u32 %s343, 1
        %s626 = scalar_lea.sflag [#allocation4], %s625
        %s627 = sand.u32 %s343, 1
        %s628 = smul.addr %s627, 8
        %s629 = scalar_lea.vmem [#allocation19], %s628
        %v631 = vld [vmem:[%s539] sm:$0xff]
        %v632 = vlaneseq
        %v633 = vand.u32 %v632, 127
        %vm634 = vcmp.lt.s32.totalorder %v633, 32
        %v635 = vsel %vm634, 1, 0
        %v636 = vcvt.s32.f32 %v635
        %v637 = vld [vmem:[#allocation5] sm:$0x1]
        %v638 = vld [vmem:[#allocation5 + $0x1] sm:$0x1]
        %639 = vadd.xlane.f32.xlu0 %v631
        %v640 = vpop.xlane.xlu0 %639
        %v641 = vmul.f32 %v640, 0.03125
        %v642 = vsub.f32 %v631, %v641
        %v643 = vmul.f32 %v642, %v636
        %v644 = vmul.f32 %v643, %v643
        %645 = vadd.xlane.f32.xlu0 %v644
        %v646 = vpop.xlane.xlu0 %645
        %v647 = vmul.f32 %v646, 0.03125
        %v648 = vadd.f32 %v647, 1e-05
        %v649 = vrsqrt.pop %v648
        %v650 = vmul.f32 %v649, %v648
        %v651 = vmul.f32 %v650, %v649
        %v652 = vmul.f32 0.5, %v651
        %v653 = vsub.f32 1.5, %v652
        %v654 = vmul.f32 %v649, %v653
        %vm655 = vweird.f32 %v648
        %vm656 = vweird.f32 %v649
        %vm657 = vmor %vm655, %vm656
        %v658 = vsel %vm657, %v649, %v654
        %v659 = vmul.f32 %v643, %v658
        %v660 = vperm.slane %v637, 0
        %v661 = vmul.f32 %v659, %v660
        %v662 = vperm.slane %v638, 0
        %v663 = vadd.f32 %v661, %v662
        %v664 = vpack.c.bf16 %v663, %v663
        %v665 = vld [vmem:[#allocation7] sm:$0xff]
        %v666 = vld [vmem:[#allocation7 + $0x8] sm:$0xf]
        %v667 = vld [vmem:[#allocation7 + $0xc] sm:$0xff]
        %v668 = vld [vmem:[#allocation7 + $0x14] sm:$0xf]
        %v669 = vld [vmem:[#allocation7 + $0x18] sm:$0xff]
        %v670 = vld [vmem:[#allocation7 + $0x20] sm:$0xf]
        %v671 = vld [vmem:[#allocation7 + $0x24] sm:$0xff]
        %v672 = vld [vmem:[#allocation7 + $0x2c] sm:$0xf]
        %v673 = vld [vmem:[#allocation7 + $0x30] sm:$0xff]
        %v674 = vld [vmem:[#allocation7 + $0x38] sm:$0xf]
        %v675 = vld [vmem:[#allocation7 + $0x3c] sm:$0xff]
        %v676 = vld [vmem:[#allocation7 + $0x44] sm:$0xf]
        %v677 = vld [vmem:[#allocation7 + $0x48] sm:$0xff]
        %v678 = vld [vmem:[#allocation7 + $0x50] sm:$0xf]
        %v679 = vld [vmem:[#allocation7 + $0x54] sm:$0xff]
        %v680 = vld [vmem:[#allocation7 + $0x5c] sm:$0xf]
        %v681 = vld [vmem:[#allocation7 + $0x60] sm:$0xff]
        %v682 = vld [vmem:[#allocation7 + $0x68] sm:$0xf]
        %v683 = vld [vmem:[#allocation7 + $0x6c] sm:$0xff]
        %v684 = vld [vmem:[#allocation7 + $0x74] sm:$0xf]
        %v685 = vld [vmem:[#allocation7 + $0x78] sm:$0xff]
        %v686 = vld [vmem:[#allocation7 + $0x80] sm:$0xf]
        %v687 = vld [vmem:[#allocation7 + $0x84] sm:$0xff]
        %v688 = vld [vmem:[#allocation7 + $0x8c] sm:$0xf]
        %v689 = vld [vmem:[#allocation7 + $0x90] sm:$0xff]
        %v690 = vld [vmem:[#allocation7 + $0x98] sm:$0xf]
        %v691 = vld [vmem:[#allocation7 + $0x9c] sm:$0xff]
        %v692 = vld [vmem:[#allocation7 + $0xa4] sm:$0xf]
        %v693 = vld [vmem:[#allocation7 + $0xa8] sm:$0xff]
        %v694 = vld [vmem:[#allocation7 + $0xb0] sm:$0xf]
        %v695 = vld [vmem:[#allocation7 + $0xb4] sm:$0xff]
        %v696 = vld [vmem:[#allocation7 + $0xbc] sm:$0xf]
        %v697 = vld [vmem:[#allocation8] sm:$0x7]
        %v699 = vperm.slane %v697, 0
        %v700 = vperm.slane %v697, 1
        %v701 = vperm.slane %v697, 2
        %v737 = vunpack.c.l.b16 %v665
        %v738 = vunpack.c.h.b16 %v665
        %v739 = vunpack.c.l.b16 %v666
        %v740 = vunpack.c.l.b16 %v667
        %v741 = vunpack.c.h.b16 %v667
        %v742 = vunpack.c.l.b16 %v668
        %v743 = vunpack.c.l.b16 %v669
        %v744 = vunpack.c.h.b16 %v669
        %v745 = vunpack.c.l.b16 %v670
        %v746 = vunpack.c.l.b16 %v671
        %v747 = vunpack.c.h.b16 %v671
        %v748 = vunpack.c.l.b16 %v672
        %v749 = vunpack.c.l.b16 %v673
        %v750 = vunpack.c.h.b16 %v673
        %v751 = vunpack.c.l.b16 %v674
        %v752 = vunpack.c.l.b16 %v675
        %v753 = vunpack.c.h.b16 %v675
        %v754 = vunpack.c.l.b16 %v676
        %v755 = vunpack.c.l.b16 %v677
        %v756 = vunpack.c.h.b16 %v677
        %v757 = vunpack.c.l.b16 %v678
        %v758 = vunpack.c.l.b16 %v679
        %v759 = vunpack.c.h.b16 %v679
        %v760 = vunpack.c.l.b16 %v680
        %v761 = vunpack.c.l.b16 %v681
        %v762 = vunpack.c.h.b16 %v681
        %v763 = vunpack.c.l.b16 %v682
        %v764 = vunpack.c.l.b16 %v683
        %v765 = vunpack.c.h.b16 %v683
        %v766 = vunpack.c.l.b16 %v684
        %v767 = vunpack.c.l.b16 %v685
        %v768 = vunpack.c.h.b16 %v685
        %v769 = vunpack.c.l.b16 %v686
        %v770 = vunpack.c.l.b16 %v687
        %v771 = vunpack.c.h.b16 %v687
        %v772 = vunpack.c.l.b16 %v688
        %v773 = vunpack.c.l.b16 %v689
        %v774 = vunpack.c.h.b16 %v689
        %v775 = vunpack.c.l.b16 %v690
        %v776 = vunpack.c.l.b16 %v691
        %v777 = vunpack.c.h.b16 %v691
        %v778 = vunpack.c.l.b16 %v692
        %v779 = vunpack.c.l.b16 %v693
        %v780 = vunpack.c.h.b16 %v693
        %v781 = vunpack.c.l.b16 %v694
        %v782 = vunpack.c.l.b16 %v695
        %v783 = vunpack.c.h.b16 %v695
        %v784 = vunpack.c.l.b16 %v696
        %v785 = vpack.c.b16 %v740, %v737
        %v786 = vpack.c.b16 %v741, %v738
        %v787 = vpack.c.b16 %v742, %v739
        %v788 = vpack.c.b16 %v746, %v743
        %v789 = vpack.c.b16 %v747, %v744
        %v790 = vpack.c.b16 %v748, %v745
        %v791 = vpack.c.b16 %v752, %v749
        %v792 = vpack.c.b16 %v753, %v750
        %v793 = vpack.c.b16 %v754, %v751
        %v794 = vpack.c.b16 %v758, %v755
        %v795 = vpack.c.b16 %v759, %v756
        %v796 = vpack.c.b16 %v760, %v757
        %v797 = vpack.c.b16 %v764, %v761
        %v798 = vpack.c.b16 %v765, %v762
        %v799 = vpack.c.b16 %v766, %v763
        %v800 = vpack.c.b16 %v770, %v767
        %v801 = vpack.c.b16 %v771, %v768
        %v802 = vpack.c.b16 %v772, %v769
        %v803 = vpack.c.b16 %v776, %v773
        %v804 = vpack.c.b16 %v777, %v774
        %v805 = vpack.c.b16 %v778, %v775
        %v806 = vpack.c.b16 %v782, %v779
        %v807 = vpack.c.b16 %v783, %v780
        %v808 = vpack.c.b16 %v784, %v781
        %833 = vmatpush.bf16.msra.mxu0 %v806
        %834 = vmatpush.bf16.msra.mxu0 %v803
        %835 = vmatpush.bf16.msra.mxu0 %v800
        %836 = vmatpush.bf16.msra.mxu0 %v797
        %837 = vmatpush.bf16.msra.mxu0 %v794
        %838 = vmatpush.bf16.msra.mxu0 %v791
        %839 = vmatpush.bf16.msra.mxu0 %v788
        %840 = vmatpush.bf16.msra.mxu0 %v785
        %841 = vmatmul.bf16.gmra.mxu0 %v664
        %v842 = vpop.f32.mrf.mxu0
        %v843 = vadd.f32 %v699, %v842
        %v844 = vpop.f32.mrf.mxu0
        %845 = vdwg.mxu0
        %846 = vmatpush.bf16.msra.mxu0 %v807
        %847 = vmatpush.bf16.msra.mxu0 %v804
        %848 = vmatpush.bf16.msra.mxu0 %v801
        %849 = vmatpush.bf16.msra.mxu0 %v798
        %850 = vmatpush.bf16.msra.mxu0 %v795
        %851 = vmatpush.bf16.msra.mxu0 %v792
        %852 = vmatpush.bf16.msra.mxu0 %v789
        %853 = vmatpush.bf16.msra.mxu0 %v786
        %854 = vmatmul.bf16.gmra.mxu0 %v664
        %v855 = vpop.f32.mrf.mxu0
        %v856 = vadd.f32 %v700, %v855
        %v857 = vpop.f32.mrf.mxu0
        %858 = vdwg.mxu0
        %859 = vmatpush.bf16.msra.mxu0 %v808
        %860 = vmatpush.bf16.msra.mxu0 %v805
        %861 = vmatpush.bf16.msra.mxu0 %v802
        %862 = vmatpush.bf16.msra.mxu0 %v799
        %863 = vmatpush.bf16.msra.mxu0 %v796
        %864 = vmatpush.bf16.msra.mxu0 %v793
        %865 = vmatpush.bf16.msra.mxu0 %v790
        %866 = vmatpush.bf16.msra.mxu0 %v787
        %867 = vmatmul.bf16.gmra.mxu0 %v664
        %v868 = vpop.f32.mrf.mxu0
        %v869 = vadd.f32 %v701, %v868
        %v870 = vpop.f32.mrf.mxu0
        %871 = vdwg.mxu0
        %v872 = vpack.c.bf16 %v856, %v843
        %v873 = vpack.c.bf16 %v869, %v869
        %v875 = vrot.slane %v872, 4
        %vm876 = vcmask 261120
        %v878 = vsel %vm876, %v872, 0
        %v881 = vsel %vm876, %v875, 0
        %883 = vmatpush.bf16.xpose.msra.mxu0 0
        %884 = vmatpush.bf16.xpose.msra.mxu0 0
        %885 = vmatpush.bf16.xpose.msra.mxu0 0
        %886 = vmatpush.bf16.xpose.msra.mxu0 0
        %887 = vmatpush.bf16.xpose.msra.mxu0 0
        %888 = vmatpush.bf16.xpose.msra.mxu0 0
        %889 = vmatpush.bf16.xpose.msra.mxu0 0
        %890 = vmatpush.bf16.xpose.msra.mxu0 %v881
        %891 = vmatmul.bf16.gmra.mxu0 %v878
        %v892 = vpop.f32.mrf.mxu0
        %v893 = vadd.f32 0.0, %v892
        %v894 = vpop.f32.mrf.mxu0
        %895 = vdwg.mxu0
        %v896 = vmul.f32 %v893, 0.35355338
        %vm897 = vcmask 64512
        %v898 = vsel %vm897, %v896, -inf
        %899 = vmax.xlane.f32.xlu0 %v898
        %v900 = vpop.xlane.xlu0 %899
        %v901 = vsub.f32 %v896, %v900
        %v902 = vmul.f32 %v901, 1.442695
        %v903 = vpow.pop %v902
        %v904 = vsel %vm897, %v903, 0.0
        %905 = vadd.xlane.f32.xlu0 %v904
        %v906 = vpop.xlane.xlu0 %905
        %v907 = vrcp.pop %v906
        %v908 = vmul.f32 %v903, %v907
        %v909 = vpack.c.bf16 %v908, %v908
        %v911 = vsel %vm897, %v909, 0
        %vm913 = vcmask 1043456
        %v915 = vsel %vm913, %v873, 0
        %917 = vmatpush.bf16.msra.mxu0 0
        %918 = vmatpush.bf16.msra.mxu0 0
        %919 = vmatpush.bf16.msra.mxu0 0
        %920 = vmatpush.bf16.msra.mxu0 0
        %921 = vmatpush.bf16.msra.mxu0 0
        %922 = vmatpush.bf16.msra.mxu0 0
        %923 = vmatpush.bf16.msra.mxu0 0
        %924 = vmatpush.bf16.msra.mxu0 %v915
        %925 = vmatmul.bf16.gmra.mxu0 %v911
        %v926 = vpop.f32.mrf.mxu0
        %v927 = vadd.f32 0.0, %v926
        %v928 = vpop.f32.mrf.mxu0
        %929 = vdwg.mxu0
        %v930 = vpack.c.bf16 %v927, %v927
        %v931 = vld [vmem:[#allocation10] sm:$0xf]
        %v932 = vld [vmem:[#allocation10 + $0x4] sm:$0xf]
        %v933 = vld [vmem:[#allocation10 + $0x8] sm:$0xf]
        %v934 = vld [vmem:[#allocation10 + $0xc] sm:$0xf]
        %935 = vrot.lane.b32.xlu0 %v872, 96
        %v936 = vpop.permute.xlu0 %935
        %v937 = vrot.slane %v936, 4
        %v938 = vunpack.c.l.b16 %v872
        %v939 = vpack.c.b16 %v938, %v938
        %940 = vrot.lane.b32.xlu0 %v939, 96
        %v941 = vpop.permute.xlu0 %940
        %v943 = vsel %vm876, %v941, 0
        %v946 = vsel %vm876, %v937, 0
        %948 = vmatpush.bf16.xpose.msra.mxu0 0
        %949 = vmatpush.bf16.xpose.msra.mxu0 0
        %950 = vmatpush.bf16.xpose.msra.mxu0 0
        %951 = vmatpush.bf16.xpose.msra.mxu0 0
        %952 = vmatpush.bf16.xpose.msra.mxu0 0
        %953 = vmatpush.bf16.xpose.msra.mxu0 0
        %954 = vmatpush.bf16.xpose.msra.mxu0 0
        %955 = vmatpush.bf16.xpose.msra.mxu0 %v946
        %956 = vmatmul.bf16.gmra.mxu0 %v943
        %v957 = vpop.f32.mrf.mxu0
        %v958 = vadd.f32 0.0, %v957
        %v959 = vpop.f32.mrf.mxu0
        %960 = vdwg.mxu0
        %v961 = vmul.f32 %v958, 0.35355338
        %v962 = vsel %vm897, %v961, -inf
        %963 = vmax.xlane.f32.xlu0 %v962
        %v964 = vpop.xlane.xlu0 %963
        %v965 = vsub.f32 %v961, %v964
        %v966 = vmul.f32 %v965, 1.442695
        %v967 = vpow.pop %v966
        %v968 = vsel %vm897, %v967, 0.0
        %969 = vadd.xlane.f32.xlu0 %v968
        %v970 = vpop.xlane.xlu0 %969
        %v971 = vrcp.pop %v970
        %v972 = vmul.f32 %v967, %v971
        %v973 = vpack.c.bf16 %v972, %v972
        %v975 = vunpack.c.l.b16 %v873
        %v976 = vpack.c.b16 %v975, %v975
        %977 = vrot.lane.b32.xlu0 %v976, 96
        %v978 = vpop.permute.xlu0 %977
        %v980 = vsel %vm897, %v973, 0
        %v983 = vsel %vm913, %v978, 0
        %985 = vmatpush.bf16.msra.mxu0 0
        %986 = vmatpush.bf16.msra.mxu0 0
        %987 = vmatpush.bf16.msra.mxu0 0
        %988 = vmatpush.bf16.msra.mxu0 0
        %989 = vmatpush.bf16.msra.mxu0 0
        %990 = vmatpush.bf16.msra.mxu0 0
        %991 = vmatpush.bf16.msra.mxu0 0
        %992 = vmatpush.bf16.msra.mxu0 %v983
        %993 = vmatmul.bf16.gmra.mxu0 %v980
        %v994 = vpop.f32.mrf.mxu0
        %v995 = vadd.f32 0.0, %v994
        %v996 = vpop.f32.mrf.mxu0
        %997 = vdwg.mxu0
        %v998 = vpack.c.bf16 %v995, %v995
        %v999 = vld [vmem:[#allocation10 + $0x10] sm:$0xf]
        %v1000 = vld [vmem:[#allocation10 + $0x14] sm:$0xf]
        %v1001 = vld [vmem:[#allocation10 + $0x18] sm:$0xf]
        %v1002 = vld [vmem:[#allocation10 + $0x1c] sm:$0xf]
        %v1007 = vunpack.c.l.b16 %v999
        %v1008 = vunpack.c.l.b16 %v1000
        %v1009 = vunpack.c.l.b16 %v1001
        %v1010 = vunpack.c.l.b16 %v1002
        %v1011 = vpack.c.b16 %v1008, %v1007
        %v1012 = vpack.c.b16 %v1010, %v1009
        %v1016 = vsel %vm876, %v998, 0
        %1018 = vmatpush.bf16.msra.mxu0 0
        %1019 = vmatpush.bf16.msra.mxu0 0
        %1020 = vmatpush.bf16.msra.mxu0 0
        %1021 = vmatpush.bf16.msra.mxu0 0
        %1022 = vmatpush.bf16.msra.mxu0 0
        %1023 = vmatpush.bf16.msra.mxu0 0
        %1024 = vmatpush.bf16.msra.mxu0 %v1012
        %1025 = vmatpush.bf16.msra.mxu0 %v1011
        %1026 = vmatmul.bf16.gmra.mxu0 %v1016
        %v1027 = vpop.f32.mrf.mxu0
        %v1028 = vadd.f32 0.0, %v1027
        %v1029 = vpop.f32.mrf.mxu0
        %1030 = vdwg.mxu0
        %v1035 = vunpack.c.l.b16 %v931
        %v1036 = vunpack.c.l.b16 %v932
        %v1037 = vunpack.c.l.b16 %v933
        %v1038 = vunpack.c.l.b16 %v934
        %v1039 = vpack.c.b16 %v1036, %v1035
        %v1040 = vpack.c.b16 %v1038, %v1037
        %v1044 = vsel %vm876, %v930, 0
        %1046 = vmatpush.bf16.msra.mxu0 0
        %1047 = vmatpush.bf16.msra.mxu0 0
        %1048 = vmatpush.bf16.msra.mxu0 0
        %1049 = vmatpush.bf16.msra.mxu0 0
        %1050 = vmatpush.bf16.msra.mxu0 0
        %1051 = vmatpush.bf16.msra.mxu0 0
        %1052 = vmatpush.bf16.msra.mxu0 %v1040
        %1053 = vmatpush.bf16.msra.mxu0 %v1039
        %1054 = vmatmul.bf16.gmra.mxu0 %v1044
        %v1055 = vpop.f32.mrf.mxu0
        %v1056 = vadd.f32 %v1028, %v1055
        %v1057 = vpop.f32.mrf.mxu0
        %1058 = vdwg.mxu0
        %1059 = vrot.lane.b32.xlu0 %v872, 64
        %v1060 = vpop.permute.xlu0 %1059
        %v1061 = vrot.slane %v1060, 4
        %1062 = vrot.lane.b32.xlu0 %v939, 64
        %v1063 = vpop.permute.xlu0 %1062
        %v1065 = vsel %vm876, %v1063, 0
        %v1068 = vsel %vm876, %v1061, 0
        %1070 = vmatpush.bf16.xpose.msra.mxu0 0
        %1071 = vmatpush.bf16.xpose.msra.mxu0 0
        %1072 = vmatpush.bf16.xpose.msra.mxu0 0
        %1073 = vmatpush.bf16.xpose.msra.mxu0 0
        %1074 = vmatpush.bf16.xpose.msra.mxu0 0
        %1075 = vmatpush.bf16.xpose.msra.mxu0 0
        %1076 = vmatpush.bf16.xpose.msra.mxu0 0
        %1077 = vmatpush.bf16.xpose.msra.mxu0 %v1068
        %1078 = vmatmul.bf16.gmra.mxu0 %v1065
        %v1079 = vpop.f32.mrf.mxu0
        %v1080 = vadd.f32 0.0, %v1079
        %v1081 = vpop.f32.mrf.mxu0
        %1082 = vdwg.mxu0
        %v1083 = vmul.f32 %v1080, 0.35355338
        %v1084 = vsel %vm897, %v1083, -inf
        %1085 = vmax.xlane.f32.xlu0 %v1084
        %v1086 = vpop.xlane.xlu0 %1085
        %v1087 = vsub.f32 %v1083, %v1086
        %v1088 = vmul.f32 %v1087, 1.442695
        %v1089 = vpow.pop %v1088
        %v1090 = vsel %vm897, %v1089, 0.0
        %1091 = vadd.xlane.f32.xlu0 %v1090
        %v1092 = vpop.xlane.xlu0 %1091
        %v1093 = vrcp.pop %v1092
        %v1094 = vmul.f32 %v1089, %v1093
        %v1095 = vpack.c.bf16 %v1094, %v1094
        %1096 = vrot.lane.b32.xlu0 %v976, 64
        %v1097 = vpop.permute.xlu0 %1096
        %v1099 = vsel %vm897, %v1095, 0
        %v1102 = vsel %vm913, %v1097, 0
        %1104 = vmatpush.bf16.msra.mxu0 0
        %1105 = vmatpush.bf16.msra.mxu0 0
        %1106 = vmatpush.bf16.msra.mxu0 0
        %1107 = vmatpush.bf16.msra.mxu0 0
        %1108 = vmatpush.bf16.msra.mxu0 0
        %1109 = vmatpush.bf16.msra.mxu0 0
        %1110 = vmatpush.bf16.msra.mxu0 0
        %1111 = vmatpush.bf16.msra.mxu0 %v1102
        %1112 = vmatmul.bf16.gmra.mxu0 %v1099
        %v1113 = vpop.f32.mrf.mxu0
        %v1114 = vadd.f32 0.0, %v1113
        %v1115 = vpop.f32.mrf.mxu0
        %1116 = vdwg.mxu0
        %v1117 = vpack.c.bf16 %v1114, %v1114
        %v1118 = vld [vmem:[#allocation10 + $0x20] sm:$0xf]
        %v1119 = vld [vmem:[#allocation10 + $0x24] sm:$0xf]
        %v1120 = vld [vmem:[#allocation10 + $0x28] sm:$0xf]
        %v1121 = vld [vmem:[#allocation10 + $0x2c] sm:$0xf]
        %v1126 = vunpack.c.l.b16 %v1118
        %v1127 = vunpack.c.l.b16 %v1119
        %v1128 = vunpack.c.l.b16 %v1120
        %v1129 = vunpack.c.l.b16 %v1121
        %v1130 = vpack.c.b16 %v1127, %v1126
        %v1131 = vpack.c.b16 %v1129, %v1128
        %v1135 = vsel %vm876, %v1117, 0
        %1137 = vmatpush.bf16.msra.mxu0 0
        %1138 = vmatpush.bf16.msra.mxu0 0
        %1139 = vmatpush.bf16.msra.mxu0 0
        %1140 = vmatpush.bf16.msra.mxu0 0
        %1141 = vmatpush.bf16.msra.mxu0 0
        %1142 = vmatpush.bf16.msra.mxu0 0
        %1143 = vmatpush.bf16.msra.mxu0 %v1131
        %1144 = vmatpush.bf16.msra.mxu0 %v1130
        %1145 = vmatmul.bf16.gmra.mxu0 %v1135
        %v1146 = vpop.f32.mrf.mxu0
        %v1147 = vadd.f32 0.0, %v1146
        %v1148 = vpop.f32.mrf.mxu0
        %1149 = vdwg.mxu0
        %v1150 = vadd.f32 %v1056, %v1147
        %1151 = vrot.lane.b32.xlu0 %v872, 32
        %v1152 = vpop.permute.xlu0 %1151
        %v1153 = vrot.slane %v1152, 4
        %1154 = vrot.lane.b32.xlu0 %v939, 32
        %v1155 = vpop.permute.xlu0 %1154
        %v1157 = vsel %vm876, %v1155, 0
        %v1160 = vsel %vm876, %v1153, 0
        %1162 = vmatpush.bf16.xpose.msra.mxu0 0
        %1163 = vmatpush.bf16.xpose.msra.mxu0 0
        %1164 = vmatpush.bf16.xpose.msra.mxu0 0
        %1165 = vmatpush.bf16.xpose.msra.mxu0 0
        %1166 = vmatpush.bf16.xpose.msra.mxu0 0
        %1167 = vmatpush.bf16.xpose.msra.mxu0 0
        %1168 = vmatpush.bf16.xpose.msra.mxu0 0
        %1169 = vmatpush.bf16.xpose.msra.mxu0 %v1160
        %1170 = vmatmul.bf16.gmra.mxu0 %v1157
        %v1171 = vpop.f32.mrf.mxu0
        %v1172 = vadd.f32 0.0, %v1171
        %v1173 = vpop.f32.mrf.mxu0
        %1174 = vdwg.mxu0
        %v1175 = vmul.f32 %v1172, 0.35355338
        %v1176 = vsel %vm897, %v1175, -inf
        %1177 = vmax.xlane.f32.xlu0 %v1176
        %v1178 = vpop.xlane.xlu0 %1177
        %v1179 = vsub.f32 %v1175, %v1178
        %v1180 = vmul.f32 %v1179, 1.442695
        %v1181 = vpow.pop %v1180
        %v1182 = vsel %vm897, %v1181, 0.0
        %1183 = vadd.xlane.f32.xlu0 %v1182
        %v1184 = vpop.xlane.xlu0 %1183
        %v1185 = vrcp.pop %v1184
        %v1186 = vmul.f32 %v1181, %v1185
        %v1187 = vpack.c.bf16 %v1186, %v1186
        %1188 = vrot.lane.b32.xlu0 %v976, 32
        %v1189 = vpop.permute.xlu0 %1188
        %v1191 = vsel %vm897, %v1187, 0
        %v1194 = vsel %vm913, %v1189, 0
        %1196 = vmatpush.bf16.msra.mxu0 0
        %1197 = vmatpush.bf16.msra.mxu0 0
        %1198 = vmatpush.bf16.msra.mxu0 0
        %1199 = vmatpush.bf16.msra.mxu0 0
        %1200 = vmatpush.bf16.msra.mxu0 0
        %1201 = vmatpush.bf16.msra.mxu0 0
        %1202 = vmatpush.bf16.msra.mxu0 0
        %1203 = vmatpush.bf16.msra.mxu0 %v1194
        %1204 = vmatmul.bf16.gmra.mxu0 %v1191
        %v1205 = vpop.f32.mrf.mxu0
        %v1206 = vadd.f32 0.0, %v1205
        %v1207 = vpop.f32.mrf.mxu0
        %1208 = vdwg.mxu0
        %v1209 = vpack.c.bf16 %v1206, %v1206
        %v1210 = vld [vmem:[#allocation10 + $0x30] sm:$0xf]
        %v1211 = vld [vmem:[#allocation10 + $0x34] sm:$0xf]
        %v1212 = vld [vmem:[#allocation10 + $0x38] sm:$0xf]
        %v1213 = vld [vmem:[#allocation10 + $0x3c] sm:$0xf]
        %v1218 = vunpack.c.l.b16 %v1210
        %v1219 = vunpack.c.l.b16 %v1211
        %v1220 = vunpack.c.l.b16 %v1212
        %v1221 = vunpack.c.l.b16 %v1213
        %v1222 = vpack.c.b16 %v1219, %v1218
        %v1223 = vpack.c.b16 %v1221, %v1220
        %v1227 = vsel %vm876, %v1209, 0
        %1229 = vmatpush.bf16.msra.mxu0 0
        %1230 = vmatpush.bf16.msra.mxu0 0
        %1231 = vmatpush.bf16.msra.mxu0 0
        %1232 = vmatpush.bf16.msra.mxu0 0
        %1233 = vmatpush.bf16.msra.mxu0 0
        %1234 = vmatpush.bf16.msra.mxu0 0
        %1235 = vmatpush.bf16.msra.mxu0 %v1223
        %1236 = vmatpush.bf16.msra.mxu0 %v1222
        %1237 = vmatmul.bf16.gmra.mxu0 %v1227
        %v1238 = vpop.f32.mrf.mxu0
        %v1239 = vadd.f32 0.0, %v1238
        %v1240 = vpop.f32.mrf.mxu0
        %1241 = vdwg.mxu0
        %v1242 = vadd.f32 %v1150, %v1239
        %v1243 = vld [vmem:[%s5] sm:$0x1]
        %v1245 = vperm.slane %v1243, 0
        %v1247 = vadd.f32 %v1242, %v1245
        %v1248 = vld [vmem:[#allocation14] sm:$0xff]
        %v1249 = vld [vmem:[#allocation14 + $0x8] sm:$0xf]
        %v1250 = vld [vmem:[#allocation14 + $0xc] sm:$0xff]
        %v1251 = vld [vmem:[#allocation14 + $0x14] sm:$0xf]
        %v1252 = vld [vmem:[#allocation14 + $0x18] sm:$0xff]
        %v1253 = vld [vmem:[#allocation14 + $0x20] sm:$0xf]
        %v1254 = vld [vmem:[#allocation14 + $0x24] sm:$0xff]
        %v1255 = vld [vmem:[#allocation14 + $0x2c] sm:$0xf]
        %v1256 = vld [vmem:[#allocation14 + $0x30] sm:$0xff]
        %v1257 = vld [vmem:[#allocation14 + $0x38] sm:$0xf]
        %v1258 = vld [vmem:[#allocation14 + $0x3c] sm:$0xff]
        %v1259 = vld [vmem:[#allocation14 + $0x44] sm:$0xf]
        %v1260 = vld [vmem:[#allocation14 + $0x48] sm:$0xff]
        %v1261 = vld [vmem:[#allocation14 + $0x50] sm:$0xf]
        %v1262 = vld [vmem:[#allocation14 + $0x54] sm:$0xff]
        %v1263 = vld [vmem:[#allocation14 + $0x5c] sm:$0xf]
        %v1264 = vld [vmem:[#allocation14 + $0x60] sm:$0xff]
        %v1265 = vld [vmem:[#allocation14 + $0x68] sm:$0xf]
        %v1266 = vld [vmem:[#allocation14 + $0x6c] sm:$0xff]
        %v1267 = vld [vmem:[#allocation14 + $0x74] sm:$0xf]
        %v1268 = vld [vmem:[#allocation14 + $0x78] sm:$0xff]
        %v1269 = vld [vmem:[#allocation14 + $0x80] sm:$0xf]
        %v1270 = vld [vmem:[#allocation14 + $0x84] sm:$0xff]
        %v1271 = vld [vmem:[#allocation14 + $0x8c] sm:$0xf]
        %v1272 = vld [vmem:[#allocation14 + $0x90] sm:$0xff]
        %v1273 = vld [vmem:[#allocation14 + $0x98] sm:$0xf]
        %v1274 = vld [vmem:[#allocation14 + $0x9c] sm:$0xff]
        %v1275 = vld [vmem:[#allocation14 + $0xa4] sm:$0xf]
        %v1276 = vld [vmem:[#allocation14 + $0xa8] sm:$0xff]
        %v1277 = vld [vmem:[#allocation14 + $0xb0] sm:$0xf]
        %v1278 = vld [vmem:[#allocation14 + $0xb4] sm:$0xff]
        %v1279 = vld [vmem:[#allocation14 + $0xbc] sm:$0xf]
        %v1280 = vld [vmem:[#allocation16] sm:$0xff]
        %v1281 = vld [vmem:[#allocation16 + $0x8] sm:$0xff]
        %v1282 = vld [vmem:[#allocation16 + $0x10] sm:$0xff]
        %v1283 = vld [vmem:[#allocation16 + $0x18] sm:$0xff]
        %v1284 = vld [vmem:[#allocation16 + $0x20] sm:$0xff]
        %v1285 = vld [vmem:[#allocation16 + $0x28] sm:$0xff]
        %v1286 = vld [vmem:[#allocation16 + $0x30] sm:$0xff]
        %v1287 = vld [vmem:[#allocation16 + $0x38] sm:$0xff]
        %v1288 = vld [vmem:[#allocation16 + $0x40] sm:$0xff]
        %v1289 = vld [vmem:[#allocation16 + $0x48] sm:$0xff]
        %v1290 = vld [vmem:[#allocation16 + $0x50] sm:$0xff]
        %v1291 = vld [vmem:[#allocation16 + $0x58] sm:$0xff]
        %v1292 = vld [vmem:[#allocation16 + $0x60] sm:$0xff]
        %v1293 = vld [vmem:[#allocation16 + $0x68] sm:$0xff]
        %v1294 = vld [vmem:[#allocation16 + $0x70] sm:$0xff]
        %v1295 = vld [vmem:[#allocation16 + $0x78] sm:$0xff]
        %v1296 = vld [vmem:[#allocation17] sm:$0xf]
        %v1297 = vld [vmem:[#allocation17 + $0x4] sm:$0xf]
        %v1298 = vld [vmem:[#allocation17 + $0x8] sm:$0xf]
        %v1299 = vld [vmem:[#allocation17 + $0xc] sm:$0xf]
        %v1300 = vld [vmem:[#allocation17 + $0x10] sm:$0xf]
        %v1301 = vld [vmem:[#allocation17 + $0x14] sm:$0xf]
        %v1302 = vld [vmem:[#allocation17 + $0x18] sm:$0xf]
        %v1303 = vld [vmem:[#allocation17 + $0x1c] sm:$0xf]
        %v1304 = vld [vmem:[#allocation17 + $0x20] sm:$0xf]
        %v1305 = vld [vmem:[#allocation17 + $0x24] sm:$0xf]
        %v1306 = vld [vmem:[#allocation17 + $0x28] sm:$0xf]
        %v1307 = vld [vmem:[#allocation17 + $0x2c] sm:$0xf]
        %v1308 = vld [vmem:[#allocation17 + $0x30] sm:$0xf]
        %v1309 = vld [vmem:[#allocation17 + $0x34] sm:$0xf]
        %v1310 = vld [vmem:[#allocation17 + $0x38] sm:$0xf]
        %v1311 = vld [vmem:[#allocation17 + $0x3c] sm:$0xf]
        %v1312 = vld [vmem:[%s13] ss:$2 sm:$0x3]
        %v1313 = vpack.c.bf16 %v1247, %v1247
        %v1346 = vunpack.c.l.b16 %v1248
        %v1347 = vunpack.c.h.b16 %v1248
        %v1348 = vunpack.c.l.b16 %v1249
        %v1349 = vunpack.c.l.b16 %v1250
        %v1350 = vunpack.c.h.b16 %v1250
        %v1351 = vunpack.c.l.b16 %v1251
        %v1352 = vunpack.c.l.b16 %v1252
        %v1353 = vunpack.c.h.b16 %v1252
        %v1354 = vunpack.c.l.b16 %v1253
        %v1355 = vunpack.c.l.b16 %v1254
        %v1356 = vunpack.c.h.b16 %v1254
        %v1357 = vunpack.c.l.b16 %v1255
        %v1358 = vunpack.c.l.b16 %v1256
        %v1359 = vunpack.c.h.b16 %v1256
        %v1360 = vunpack.c.l.b16 %v1257
        %v1361 = vunpack.c.l.b16 %v1258
        %v1362 = vunpack.c.h.b16 %v1258
        %v1363 = vunpack.c.l.b16 %v1259
        %v1364 = vunpack.c.l.b16 %v1260
        %v1365 = vunpack.c.h.b16 %v1260
        %v1366 = vunpack.c.l.b16 %v1261
        %v1367 = vunpack.c.l.b16 %v1262
        %v1368 = vunpack.c.h.b16 %v1262
        %v1369 = vunpack.c.l.b16 %v1263
        %v1370 = vunpack.c.l.b16 %v1264
        %v1371 = vunpack.c.h.b16 %v1264
        %v1372 = vunpack.c.l.b16 %v1265
        %v1373 = vunpack.c.l.b16 %v1266
        %v1374 = vunpack.c.h.b16 %v1266
        %v1375 = vunpack.c.l.b16 %v1267
        %v1376 = vunpack.c.l.b16 %v1268
        %v1377 = vunpack.c.h.b16 %v1268
        %v1378 = vunpack.c.l.b16 %v1269
        %v1379 = vunpack.c.l.b16 %v1270
        %v1380 = vunpack.c.h.b16 %v1270
        %v1381 = vunpack.c.l.b16 %v1271
        %v1382 = vunpack.c.l.b16 %v1272
        %v1383 = vunpack.c.h.b16 %v1272
        %v1384 = vunpack.c.l.b16 %v1273
        %v1385 = vunpack.c.l.b16 %v1274
        %v1386 = vunpack.c.h.b16 %v1274
        %v1387 = vunpack.c.l.b16 %v1275
        %v1388 = vunpack.c.l.b16 %v1276
        %v1389 = vunpack.c.h.b16 %v1276
        %v1390 = vunpack.c.l.b16 %v1277
        %v1391 = vunpack.c.l.b16 %v1278
        %v1392 = vunpack.c.h.b16 %v1278
        %v1393 = vunpack.c.l.b16 %v1279
        %v1394 = vpack.c.b16 %v1349, %v1346
        %v1395 = vpack.c.b16 %v1350, %v1347
        %v1396 = vpack.c.b16 %v1351, %v1348
        %v1397 = vpack.c.b16 %v1355, %v1352
        %v1398 = vpack.c.b16 %v1356, %v1353
        %v1399 = vpack.c.b16 %v1357, %v1354
        %v1400 = vpack.c.b16 %v1361, %v1358
        %v1401 = vpack.c.b16 %v1362, %v1359
        %v1402 = vpack.c.b16 %v1363, %v1360
        %v1403 = vpack.c.b16 %v1367, %v1364
        %v1404 = vpack.c.b16 %v1368, %v1365
        %v1405 = vpack.c.b16 %v1369, %v1366
        %v1406 = vpack.c.b16 %v1373, %v1370
        %v1407 = vpack.c.b16 %v1374, %v1371
        %v1408 = vpack.c.b16 %v1375, %v1372
        %v1409 = vpack.c.b16 %v1379, %v1376
        %v1410 = vpack.c.b16 %v1380, %v1377
        %v1411 = vpack.c.b16 %v1381, %v1378
        %v1412 = vpack.c.b16 %v1385, %v1382
        %v1413 = vpack.c.b16 %v1386, %v1383
        %v1414 = vpack.c.b16 %v1387, %v1384
        %v1415 = vpack.c.b16 %v1391, %v1388
        %v1416 = vpack.c.b16 %v1392, %v1389
        %v1417 = vpack.c.b16 %v1393, %v1390
        %1442 = vmatpush.bf16.msra.mxu0 %v1415
        %1443 = vmatpush.bf16.msra.mxu0 %v1412
        %1444 = vmatpush.bf16.msra.mxu0 %v1409
        %1445 = vmatpush.bf16.msra.mxu0 %v1406
        %1446 = vmatpush.bf16.msra.mxu0 %v1403
        %1447 = vmatpush.bf16.msra.mxu0 %v1400
        %1448 = vmatpush.bf16.msra.mxu0 %v1397
        %1449 = vmatpush.bf16.msra.mxu0 %v1394
        %1450 = vmatmul.bf16.gmra.mxu0 %v1313
        %v1451 = vpop.f32.mrf.mxu0
        %v1452 = vadd.f32 0.0, %v1451
        %v1453 = vpop.f32.mrf.mxu0
        %1454 = vdwg.mxu0
        %1455 = vmatpush.bf16.msra.mxu0 %v1416
        %1456 = vmatpush.bf16.msra.mxu0 %v1413
        %1457 = vmatpush.bf16.msra.mxu0 %v1410
        %1458 = vmatpush.bf16.msra.mxu0 %v1407
        %1459 = vmatpush.bf16.msra.mxu0 %v1404
        %1460 = vmatpush.bf16.msra.mxu0 %v1401
        %1461 = vmatpush.bf16.msra.mxu0 %v1398
        %1462 = vmatpush.bf16.msra.mxu0 %v1395
        %1463 = vmatmul.bf16.gmra.mxu0 %v1313
        %v1464 = vpop.f32.mrf.mxu0
        %v1465 = vadd.f32 0.0, %v1464
        %v1466 = vpop.f32.mrf.mxu0
        %1467 = vdwg.mxu0
        %1468 = vmatpush.bf16.msra.mxu0 %v1417
        %1469 = vmatpush.bf16.msra.mxu0 %v1414
        %1470 = vmatpush.bf16.msra.mxu0 %v1411
        %1471 = vmatpush.bf16.msra.mxu0 %v1408
        %1472 = vmatpush.bf16.msra.mxu0 %v1405
        %1473 = vmatpush.bf16.msra.mxu0 %v1402
        %1474 = vmatpush.bf16.msra.mxu0 %v1399
        %1475 = vmatpush.bf16.msra.mxu0 %v1396
        %1476 = vmatmul.bf16.gmra.mxu0 %v1313
        %v1477 = vpop.f32.mrf.mxu0
        %v1478 = vadd.f32 0.0, %v1477
        %v1479 = vpop.f32.mrf.mxu0
        %1480 = vdwg.mxu0
        %v1481 = vpack.c.bf16 %v631, %v631
        %v1498 = vunpack.c.l.b16 %v1280
        %v1499 = vunpack.c.h.b16 %v1280
        %v1500 = vunpack.c.l.b16 %v1281
        %v1501 = vunpack.c.h.b16 %v1281
        %v1502 = vunpack.c.l.b16 %v1282
        %v1503 = vunpack.c.h.b16 %v1282
        %v1504 = vunpack.c.l.b16 %v1283
        %v1505 = vunpack.c.h.b16 %v1283
        %v1506 = vunpack.c.l.b16 %v1284
        %v1507 = vunpack.c.h.b16 %v1284
        %v1508 = vunpack.c.l.b16 %v1285
        %v1509 = vunpack.c.h.b16 %v1285
        %v1510 = vunpack.c.l.b16 %v1286
        %v1511 = vunpack.c.h.b16 %v1286
        %v1512 = vunpack.c.l.b16 %v1287
        %v1513 = vunpack.c.h.b16 %v1287
        %v1514 = vunpack.c.l.b16 %v1288
        %v1515 = vunpack.c.h.b16 %v1288
        %v1516 = vunpack.c.l.b16 %v1289
        %v1517 = vunpack.c.h.b16 %v1289
        %v1518 = vunpack.c.l.b16 %v1290
        %v1519 = vunpack.c.h.b16 %v1290
        %v1520 = vunpack.c.l.b16 %v1291
        %v1521 = vunpack.c.h.b16 %v1291
        %v1522 = vunpack.c.l.b16 %v1292
        %v1523 = vunpack.c.h.b16 %v1292
        %v1524 = vunpack.c.l.b16 %v1293
        %v1525 = vunpack.c.h.b16 %v1293
        %v1526 = vunpack.c.l.b16 %v1294
        %v1527 = vunpack.c.h.b16 %v1294
        %v1528 = vunpack.c.l.b16 %v1295
        %v1529 = vunpack.c.h.b16 %v1295
        %v1530 = vpack.c.b16 %v1500, %v1498
        %v1531 = vpack.c.b16 %v1501, %v1499
        %v1532 = vpack.c.b16 %v1504, %v1502
        %v1533 = vpack.c.b16 %v1505, %v1503
        %v1534 = vpack.c.b16 %v1508, %v1506
        %v1535 = vpack.c.b16 %v1509, %v1507
        %v1536 = vpack.c.b16 %v1512, %v1510
        %v1537 = vpack.c.b16 %v1513, %v1511
        %v1538 = vpack.c.b16 %v1516, %v1514
        %v1539 = vpack.c.b16 %v1517, %v1515
        %v1540 = vpack.c.b16 %v1520, %v1518
        %v1541 = vpack.c.b16 %v1521, %v1519
        %v1542 = vpack.c.b16 %v1524, %v1522
        %v1543 = vpack.c.b16 %v1525, %v1523
        %v1544 = vpack.c.b16 %v1528, %v1526
        %v1545 = vpack.c.b16 %v1529, %v1527
        %1562 = vmatpush.bf16.msra.mxu0 %v1544
        %1563 = vmatpush.bf16.msra.mxu0 %v1542
        %1564 = vmatpush.bf16.msra.mxu0 %v1540
        %1565 = vmatpush.bf16.msra.mxu0 %v1538
        %1566 = vmatpush.bf16.msra.mxu0 %v1536
        %1567 = vmatpush.bf16.msra.mxu0 %v1534
        %1568 = vmatpush.bf16.msra.mxu0 %v1532
        %1569 = vmatpush.bf16.msra.mxu0 %v1530
        %1570 = vmatmul.bf16.gmra.mxu0 %v1481
        %v1571 = vpop.f32.mrf.mxu0
        %v1572 = vadd.f32 0.0, %v1571
        %v1573 = vpop.f32.mrf.mxu0
        %1574 = vdwg.mxu0
        %1575 = vmatpush.bf16.msra.mxu0 %v1545
        %1576 = vmatpush.bf16.msra.mxu0 %v1543
        %1577 = vmatpush.bf16.msra.mxu0 %v1541
        %1578 = vmatpush.bf16.msra.mxu0 %v1539
        %1579 = vmatpush.bf16.msra.mxu0 %v1537
        %1580 = vmatpush.bf16.msra.mxu0 %v1535
        %1581 = vmatpush.bf16.msra.mxu0 %v1533
        %1582 = vmatpush.bf16.msra.mxu0 %v1531
        %1583 = vmatmul.bf16.gmra.mxu0 %v1481
        %v1584 = vpop.f32.mrf.mxu0
        %v1585 = vadd.f32 0.0, %v1584
        %v1586 = vpop.f32.mrf.mxu0
        %1587 = vdwg.mxu0
        %v1588 = vadd.f32 %v1452, %v1572
        %v1589 = vadd.f32 %v1465, %v1585
        %v1591 = vperm.slane %v1312, 0
        %v1592 = vperm.slane %v1312, 1
        %v1595 = vsub.f32 %v1588, %v1591
        %v1596 = vsub.f32 %v1589, %v1592
        %v1597 = vxor.u32 %v1595, 2147483648
        %v1598 = vxor.u32 %v1596, 2147483648
        %v1599 = vmul.f32 %v1597, 1.442695
        %v1600 = vpow.pop %v1599
        %v1601 = vmul.f32 %v1598, 1.442695
        %v1602 = vpow.pop %v1601
        %v1603 = vadd.f32 %v1600, 1.0
        %v1604 = vadd.f32 %v1602, 1.0
        %v1605 = vrcp.pop %v1603
        %v1606 = vmul.f32 %v1603, %v1605
        %v1607 = vsub.f32 1.0, %v1606
        %v1608 = vmul.f32 %v1605, %v1607
        %v1609 = vadd.f32 %v1605, %v1608
        %vm1610 = vweird.f32 %v1603
        %vm1611 = vweird.f32 %v1605
        %vm1612 = vmor %vm1610, %vm1611
        %v1613 = vsel %vm1612, %v1605, %v1609
        %v1614 = vand.u32 2147483647, %v1603
        %vm1615 = vcmp.eq.f32.partialorder %v1614, 8.507059e+37
        %v1616 = vand.u32 %v1603, 2147483648
        %v1617 = vor.u32 1.1754944e-38, %v1616
        %v1618 = vsel %vm1615, %v1617, %v1613
        %v1619 = vmul.f32 1.0, %v1618
        %v1620 = vrcp.pop %v1604
        %v1621 = vmul.f32 %v1604, %v1620
        %v1622 = vsub.f32 1.0, %v1621
        %v1623 = vmul.f32 %v1620, %v1622
        %v1624 = vadd.f32 %v1620, %v1623
        %vm1625 = vweird.f32 %v1604
        %vm1626 = vweird.f32 %v1620
        %vm1627 = vmor %vm1625, %vm1626
        %v1628 = vsel %vm1627, %v1620, %v1624
        %v1629 = vand.u32 2147483647, %v1604
        %vm1630 = vcmp.eq.f32.partialorder %v1629, 8.507059e+37
        %v1631 = vand.u32 %v1604, 2147483648
        %v1632 = vor.u32 1.1754944e-38, %v1631
        %v1633 = vsel %vm1630, %v1632, %v1628
        %v1634 = vmul.f32 1.0, %v1633
        %v1635 = vmul.f32 %v1619, %v631
        %v1636 = vpack.c.bf16 %v1635, %v1635
        %v1653 = vunpack.c.l.b16 %v1296
        %v1654 = vunpack.c.l.b16 %v1297
        %v1655 = vunpack.c.l.b16 %v1298
        %v1656 = vunpack.c.l.b16 %v1299
        %v1657 = vunpack.c.l.b16 %v1300
        %v1658 = vunpack.c.l.b16 %v1301
        %v1659 = vunpack.c.l.b16 %v1302
        %v1660 = vunpack.c.l.b16 %v1303
        %v1661 = vunpack.c.l.b16 %v1304
        %v1662 = vunpack.c.l.b16 %v1305
        %v1663 = vunpack.c.l.b16 %v1306
        %v1664 = vunpack.c.l.b16 %v1307
        %v1665 = vunpack.c.l.b16 %v1308
        %v1666 = vunpack.c.l.b16 %v1309
        %v1667 = vunpack.c.l.b16 %v1310
        %v1668 = vunpack.c.l.b16 %v1311
        %v1669 = vpack.c.b16 %v1654, %v1653
        %v1670 = vpack.c.b16 %v1656, %v1655
        %v1671 = vpack.c.b16 %v1658, %v1657
        %v1672 = vpack.c.b16 %v1660, %v1659
        %v1673 = vpack.c.b16 %v1662, %v1661
        %v1674 = vpack.c.b16 %v1664, %v1663
        %v1675 = vpack.c.b16 %v1666, %v1665
        %v1676 = vpack.c.b16 %v1668, %v1667
        %1685 = vmatpush.bf16.msra.mxu0 %v1676
        %1686 = vmatpush.bf16.msra.mxu0 %v1675
        %1687 = vmatpush.bf16.msra.mxu0 %v1674
        %1688 = vmatpush.bf16.msra.mxu0 %v1673
        %1689 = vmatpush.bf16.msra.mxu0 %v1672
        %1690 = vmatpush.bf16.msra.mxu0 %v1671
        %1691 = vmatpush.bf16.msra.mxu0 %v1670
        %1692 = vmatpush.bf16.msra.mxu0 %v1669
        %1693 = vmatmul.bf16.gmra.mxu0 %v1636
        %v1694 = vpop.f32.mrf.mxu0
        %v1695 = vadd.f32 0.0, %v1694
        %v1696 = vpop.f32.mrf.mxu0
        %1697 = vdwg.mxu0
        %v1698 = vadd.f32 %v1478, %v1695
        %v1699 = vtanh.pop %v1698
        %v1700 = vsub.f32 %v1699, %v631
        %v1701 = vmul.f32 %v1634, %v1700
        %v1702 = vadd.f32 %v631, %v1701
        %v1703 = vld [vmem:[#allocation5 + $0x2] sm:$0x1]
        %v1704 = vld [vmem:[#allocation5 + $0x3] sm:$0x1]
        %1705 = vadd.xlane.f32.xlu0 %v1702
        %v1706 = vpop.xlane.xlu0 %1705
        %v1707 = vmul.f32 %v1706, 0.03125
        %v1708 = vsub.f32 %v1702, %v1707
        %v1709 = vmul.f32 %v1708, %v636
        %v1710 = vmul.f32 %v1709, %v1709
        %1711 = vadd.xlane.f32.xlu0 %v1710
        %v1712 = vpop.xlane.xlu0 %1711
        %v1713 = vmul.f32 %v1712, 0.03125
        %v1714 = vadd.f32 %v1713, 1e-05
        %v1715 = vrsqrt.pop %v1714
        %v1716 = vmul.f32 %v1715, %v1714
        %v1717 = vmul.f32 %v1716, %v1715
        %v1718 = vmul.f32 0.5, %v1717
        %v1719 = vsub.f32 1.5, %v1718
        %v1720 = vmul.f32 %v1715, %v1719
        %vm1721 = vweird.f32 %v1714
        %vm1722 = vweird.f32 %v1715
        %vm1723 = vmor %vm1721, %vm1722
        %v1724 = vsel %vm1723, %v1715, %v1720
        %v1725 = vmul.f32 %v1709, %v1724
        %v1726 = vperm.slane %v1703, 0
        %v1727 = vmul.f32 %v1725, %v1726
        %v1728 = vperm.slane %v1704, 0
        %v1729 = vadd.f32 %v1727, %v1728
        %v1730 = vpack.c.bf16 %v1729, %v1729
        %v1731 = vld [vmem:[#allocation11] sm:$0xf]
        %v1732 = vld [vmem:[#allocation11 + $0x4] sm:$0xf]
        %v1733 = vld [vmem:[#allocation11 + $0x8] sm:$0xf]
        %v1734 = vld [vmem:[#allocation11 + $0xc] sm:$0xf]
        %v1735 = vld [vmem:[#allocation11 + $0x10] sm:$0xf]
        %v1736 = vld [vmem:[#allocation11 + $0x14] sm:$0xf]
        %v1737 = vld [vmem:[#allocation11 + $0x18] sm:$0xf]
        %v1738 = vld [vmem:[#allocation11 + $0x1c] sm:$0xf]
        %v1739 = vld [vmem:[#allocation11 + $0x20] sm:$0xf]
        %v1740 = vld [vmem:[#allocation11 + $0x24] sm:$0xf]
        %v1741 = vld [vmem:[#allocation11 + $0x28] sm:$0xf]
        %v1742 = vld [vmem:[#allocation11 + $0x2c] sm:$0xf]
        %v1743 = vld [vmem:[#allocation11 + $0x30] sm:$0xf]
        %v1744 = vld [vmem:[#allocation11 + $0x34] sm:$0xf]
        %v1745 = vld [vmem:[#allocation11 + $0x38] sm:$0xf]
        %v1746 = vld [vmem:[#allocation11 + $0x3c] sm:$0xf]
        %v1747 = vld [vmem:[%s7] sm:$0x1]
        %v1749 = vperm.slane %v1747, 0
        %v1767 = vunpack.c.l.b16 %v1731
        %v1768 = vunpack.c.l.b16 %v1732
        %v1769 = vunpack.c.l.b16 %v1733
        %v1770 = vunpack.c.l.b16 %v1734
        %v1771 = vunpack.c.l.b16 %v1735
        %v1772 = vunpack.c.l.b16 %v1736
        %v1773 = vunpack.c.l.b16 %v1737
        %v1774 = vunpack.c.l.b16 %v1738
        %v1775 = vunpack.c.l.b16 %v1739
        %v1776 = vunpack.c.l.b16 %v1740
        %v1777 = vunpack.c.l.b16 %v1741
        %v1778 = vunpack.c.l.b16 %v1742
        %v1779 = vunpack.c.l.b16 %v1743
        %v1780 = vunpack.c.l.b16 %v1744
        %v1781 = vunpack.c.l.b16 %v1745
        %v1782 = vunpack.c.l.b16 %v1746
        %v1783 = vpack.c.b16 %v1768, %v1767
        %v1784 = vpack.c.b16 %v1770, %v1769
        %v1785 = vpack.c.b16 %v1772, %v1771
        %v1786 = vpack.c.b16 %v1774, %v1773
        %v1787 = vpack.c.b16 %v1776, %v1775
        %v1788 = vpack.c.b16 %v1778, %v1777
        %v1789 = vpack.c.b16 %v1780, %v1779
        %v1790 = vpack.c.b16 %v1782, %v1781
        %1799 = vmatpush.bf16.msra.mxu0 %v1790
        %1800 = vmatpush.bf16.msra.mxu0 %v1789
        %1801 = vmatpush.bf16.msra.mxu0 %v1788
        %1802 = vmatpush.bf16.msra.mxu0 %v1787
        %1803 = vmatpush.bf16.msra.mxu0 %v1786
        %1804 = vmatpush.bf16.msra.mxu0 %v1785
        %1805 = vmatpush.bf16.msra.mxu0 %v1784
        %1806 = vmatpush.bf16.msra.mxu0 %v1783
        %1807 = vmatmul.bf16.gmra.mxu0 %v1730
        %v1808 = vpop.f32.mrf.mxu0
        %v1809 = vadd.f32 %v1749, %v1808
        %v1810 = vpop.f32.mrf.mxu0
        %1811 = vdwg.mxu0
        %v1812 = vmax.f32 %v1809, 0.0
        %v1813 = vpack.c.bf16 %v1812, %v1812
        %v1814 = vld [vmem:[#allocation13] sm:$0xf]
        %v1815 = vld [vmem:[#allocation13 + $0x4] sm:$0xf]
        %v1816 = vld [vmem:[#allocation13 + $0x8] sm:$0xf]
        %v1817 = vld [vmem:[#allocation13 + $0xc] sm:$0xf]
        %v1818 = vld [vmem:[#allocation13 + $0x10] sm:$0xf]
        %v1819 = vld [vmem:[#allocation13 + $0x14] sm:$0xf]
        %v1820 = vld [vmem:[#allocation13 + $0x18] sm:$0xf]
        %v1821 = vld [vmem:[#allocation13 + $0x1c] sm:$0xf]
        %v1822 = vld [vmem:[#allocation13 + $0x20] sm:$0xf]
        %v1823 = vld [vmem:[#allocation13 + $0x24] sm:$0xf]
        %v1824 = vld [vmem:[#allocation13 + $0x28] sm:$0xf]
        %v1825 = vld [vmem:[#allocation13 + $0x2c] sm:$0xf]
        %v1826 = vld [vmem:[#allocation13 + $0x30] sm:$0xf]
        %v1827 = vld [vmem:[#allocation13 + $0x34] sm:$0xf]
        %v1828 = vld [vmem:[#allocation13 + $0x38] sm:$0xf]
        %v1829 = vld [vmem:[#allocation13 + $0x3c] sm:$0xf]
        %v1830 = vld [vmem:[%s9] sm:$0x1]
        %v1832 = vperm.slane %v1830, 0
        %v1850 = vunpack.c.l.b16 %v1814
        %v1851 = vunpack.c.l.b16 %v1815
        %v1852 = vunpack.c.l.b16 %v1816
        %v1853 = vunpack.c.l.b16 %v1817
        %v1854 = vunpack.c.l.b16 %v1818
        %v1855 = vunpack.c.l.b16 %v1819
        %v1856 = vunpack.c.l.b16 %v1820
        %v1857 = vunpack.c.l.b16 %v1821
        %v1858 = vunpack.c.l.b16 %v1822
        %v1859 = vunpack.c.l.b16 %v1823
        %v1860 = vunpack.c.l.b16 %v1824
        %v1861 = vunpack.c.l.b16 %v1825
        %v1862 = vunpack.c.l.b16 %v1826
        %v1863 = vunpack.c.l.b16 %v1827
        %v1864 = vunpack.c.l.b16 %v1828
        %v1865 = vunpack.c.l.b16 %v1829
        %v1866 = vpack.c.b16 %v1851, %v1850
        %v1867 = vpack.c.b16 %v1853, %v1852
        %v1868 = vpack.c.b16 %v1855, %v1854
        %v1869 = vpack.c.b16 %v1857, %v1856
        %v1870 = vpack.c.b16 %v1859, %v1858
        %v1871 = vpack.c.b16 %v1861, %v1860
        %v1872 = vpack.c.b16 %v1863, %v1862
        %v1873 = vpack.c.b16 %v1865, %v1864
        %1882 = vmatpush.bf16.msra.mxu0 %v1873
        %1883 = vmatpush.bf16.msra.mxu0 %v1872
        %1884 = vmatpush.bf16.msra.mxu0 %v1871
        %1885 = vmatpush.bf16.msra.mxu0 %v1870
        %1886 = vmatpush.bf16.msra.mxu0 %v1869
        %1887 = vmatpush.bf16.msra.mxu0 %v1868
        %1888 = vmatpush.bf16.msra.mxu0 %v1867
        %1889 = vmatpush.bf16.msra.mxu0 %v1866
        %1890 = vmatmul.bf16.gmra.mxu0 %v1813
        %v1891 = vpop.f32.mrf.mxu0
        %v1892 = vadd.f32 %v1832, %v1891
        %v1893 = vpop.f32.mrf.mxu0
        %1894 = vdwg.mxu0
        %s1895 = scalar_lea.vmem [#allocation14], 192
        %v1896 = vld [vmem:[%s1895] sm:$0xff]
        %v1897 = vld [vmem:[%s1895 + $0x8] sm:$0xf]
        %v1898 = vld [vmem:[%s1895 + $0xc] sm:$0xff]
        %v1899 = vld [vmem:[%s1895 + $0x14] sm:$0xf]
        %v1900 = vld [vmem:[%s1895 + $0x18] sm:$0xff]
        %v1901 = vld [vmem:[%s1895 + $0x20] sm:$0xf]
        %v1902 = vld [vmem:[%s1895 + $0x24] sm:$0xff]
        %v1903 = vld [vmem:[%s1895 + $0x2c] sm:$0xf]
        %v1904 = vld [vmem:[%s1895 + $0x30] sm:$0xff]
        %v1905 = vld [vmem:[%s1895 + $0x38] sm:$0xf]
        %v1906 = vld [vmem:[%s1895 + $0x3c] sm:$0xff]
        %v1907 = vld [vmem:[%s1895 + $0x44] sm:$0xf]
        %v1908 = vld [vmem:[%s1895 + $0x48] sm:$0xff]
        %v1909 = vld [vmem:[%s1895 + $0x50] sm:$0xf]
        %v1910 = vld [vmem:[%s1895 + $0x54] sm:$0xff]
        %v1911 = vld [vmem:[%s1895 + $0x5c] sm:$0xf]
        %v1912 = vld [vmem:[%s1895 + $0x60] sm:$0xff]
        %v1913 = vld [vmem:[%s1895 + $0x68] sm:$0xf]
        %v1914 = vld [vmem:[%s1895 + $0x6c] sm:$0xff]
        %v1915 = vld [vmem:[%s1895 + $0x74] sm:$0xf]
        %v1916 = vld [vmem:[%s1895 + $0x78] sm:$0xff]
        %v1917 = vld [vmem:[%s1895 + $0x80] sm:$0xf]
        %v1918 = vld [vmem:[%s1895 + $0x84] sm:$0xff]
        %v1919 = vld [vmem:[%s1895 + $0x8c] sm:$0xf]
        %v1920 = vld [vmem:[%s1895 + $0x90] sm:$0xff]
        %v1921 = vld [vmem:[%s1895 + $0x98] sm:$0xf]
        %v1922 = vld [vmem:[%s1895 + $0x9c] sm:$0xff]
        %v1923 = vld [vmem:[%s1895 + $0xa4] sm:$0xf]
        %v1924 = vld [vmem:[%s1895 + $0xa8] sm:$0xff]
        %v1925 = vld [vmem:[%s1895 + $0xb0] sm:$0xf]
        %v1926 = vld [vmem:[%s1895 + $0xb4] sm:$0xff]
        %v1927 = vld [vmem:[%s1895 + $0xbc] sm:$0xf]
        %s1928 = scalar_lea.vmem [#allocation16], 128
        %v1929 = vld [vmem:[%s1928] sm:$0xff]
        %v1930 = vld [vmem:[%s1928 + $0x8] sm:$0xff]
        %v1931 = vld [vmem:[%s1928 + $0x10] sm:$0xff]
        %v1932 = vld [vmem:[%s1928 + $0x18] sm:$0xff]
        %v1933 = vld [vmem:[%s1928 + $0x20] sm:$0xff]
        %v1934 = vld [vmem:[%s1928 + $0x28] sm:$0xff]
        %v1935 = vld [vmem:[%s1928 + $0x30] sm:$0xff]
        %v1936 = vld [vmem:[%s1928 + $0x38] sm:$0xff]
        %v1937 = vld [vmem:[%s1928 + $0x40] sm:$0xff]
        %v1938 = vld [vmem:[%s1928 + $0x48] sm:$0xff]
        %v1939 = vld [vmem:[%s1928 + $0x50] sm:$0xff]
        %v1940 = vld [vmem:[%s1928 + $0x58] sm:$0xff]
        %v1941 = vld [vmem:[%s1928 + $0x60] sm:$0xff]
        %v1942 = vld [vmem:[%s1928 + $0x68] sm:$0xff]
        %v1943 = vld [vmem:[%s1928 + $0x70] sm:$0xff]
        %v1944 = vld [vmem:[%s1928 + $0x78] sm:$0xff]
        %s1945 = scalar_lea.vmem [#allocation17], 64
        %v1946 = vld [vmem:[%s1945] sm:$0xf]
        %v1947 = vld [vmem:[%s1945 + $0x4] sm:$0xf]
        %v1948 = vld [vmem:[%s1945 + $0x8] sm:$0xf]
        %v1949 = vld [vmem:[%s1945 + $0xc] sm:$0xf]
        %v1950 = vld [vmem:[%s1945 + $0x10] sm:$0xf]
        %v1951 = vld [vmem:[%s1945 + $0x14] sm:$0xf]
        %v1952 = vld [vmem:[%s1945 + $0x18] sm:$0xf]
        %v1953 = vld [vmem:[%s1945 + $0x1c] sm:$0xf]
        %v1954 = vld [vmem:[%s1945 + $0x20] sm:$0xf]
        %v1955 = vld [vmem:[%s1945 + $0x24] sm:$0xf]
        %v1956 = vld [vmem:[%s1945 + $0x28] sm:$0xf]
        %v1957 = vld [vmem:[%s1945 + $0x2c] sm:$0xf]
        %v1958 = vld [vmem:[%s1945 + $0x30] sm:$0xf]
        %v1959 = vld [vmem:[%s1945 + $0x34] sm:$0xf]
        %v1960 = vld [vmem:[%s1945 + $0x38] sm:$0xf]
        %v1961 = vld [vmem:[%s1945 + $0x3c] sm:$0xf]
        %s1962 = scalar_lea.vmem %s13, 1
        %v1963 = vld [vmem:[%s1962] ss:$2 sm:$0x3]
        %v1964 = vpack.c.bf16 %v1892, %v1892
        %v1997 = vunpack.c.l.b16 %v1896
        %v1998 = vunpack.c.h.b16 %v1896
        %v1999 = vunpack.c.l.b16 %v1897
        %v2000 = vunpack.c.l.b16 %v1898
        %v2001 = vunpack.c.h.b16 %v1898
        %v2002 = vunpack.c.l.b16 %v1899
        %v2003 = vunpack.c.l.b16 %v1900
        %v2004 = vunpack.c.h.b16 %v1900
        %v2005 = vunpack.c.l.b16 %v1901
        %v2006 = vunpack.c.l.b16 %v1902
        %v2007 = vunpack.c.h.b16 %v1902
        %v2008 = vunpack.c.l.b16 %v1903
        %v2009 = vunpack.c.l.b16 %v1904
        %v2010 = vunpack.c.h.b16 %v1904
        %v2011 = vunpack.c.l.b16 %v1905
        %v2012 = vunpack.c.l.b16 %v1906
        %v2013 = vunpack.c.h.b16 %v1906
        %v2014 = vunpack.c.l.b16 %v1907
        %v2015 = vunpack.c.l.b16 %v1908
        %v2016 = vunpack.c.h.b16 %v1908
        %v2017 = vunpack.c.l.b16 %v1909
        %v2018 = vunpack.c.l.b16 %v1910
        %v2019 = vunpack.c.h.b16 %v1910
        %v2020 = vunpack.c.l.b16 %v1911
        %v2021 = vunpack.c.l.b16 %v1912
        %v2022 = vunpack.c.h.b16 %v1912
        %v2023 = vunpack.c.l.b16 %v1913
        %v2024 = vunpack.c.l.b16 %v1914
        %v2025 = vunpack.c.h.b16 %v1914
        %v2026 = vunpack.c.l.b16 %v1915
        %v2027 = vunpack.c.l.b16 %v1916
        %v2028 = vunpack.c.h.b16 %v1916
        %v2029 = vunpack.c.l.b16 %v1917
        %v2030 = vunpack.c.l.b16 %v1918
        %v2031 = vunpack.c.h.b16 %v1918
        %v2032 = vunpack.c.l.b16 %v1919
        %v2033 = vunpack.c.l.b16 %v1920
        %v2034 = vunpack.c.h.b16 %v1920
        %v2035 = vunpack.c.l.b16 %v1921
        %v2036 = vunpack.c.l.b16 %v1922
        %v2037 = vunpack.c.h.b16 %v1922
        %v2038 = vunpack.c.l.b16 %v1923
        %v2039 = vunpack.c.l.b16 %v1924
        %v2040 = vunpack.c.h.b16 %v1924
        %v2041 = vunpack.c.l.b16 %v1925
        %v2042 = vunpack.c.l.b16 %v1926
        %v2043 = vunpack.c.h.b16 %v1926
        %v2044 = vunpack.c.l.b16 %v1927
        %v2045 = vpack.c.b16 %v2000, %v1997
        %v2046 = vpack.c.b16 %v2001, %v1998
        %v2047 = vpack.c.b16 %v2002, %v1999
        %v2048 = vpack.c.b16 %v2006, %v2003
        %v2049 = vpack.c.b16 %v2007, %v2004
        %v2050 = vpack.c.b16 %v2008, %v2005
        %v2051 = vpack.c.b16 %v2012, %v2009
        %v2052 = vpack.c.b16 %v2013, %v2010
        %v2053 = vpack.c.b16 %v2014, %v2011
        %v2054 = vpack.c.b16 %v2018, %v2015
        %v2055 = vpack.c.b16 %v2019, %v2016
        %v2056 = vpack.c.b16 %v2020, %v2017
        %v2057 = vpack.c.b16 %v2024, %v2021
        %v2058 = vpack.c.b16 %v2025, %v2022
        %v2059 = vpack.c.b16 %v2026, %v2023
        %v2060 = vpack.c.b16 %v2030, %v2027
        %v2061 = vpack.c.b16 %v2031, %v2028
        %v2062 = vpack.c.b16 %v2032, %v2029
        %v2063 = vpack.c.b16 %v2036, %v2033
        %v2064 = vpack.c.b16 %v2037, %v2034
        %v2065 = vpack.c.b16 %v2038, %v2035
        %v2066 = vpack.c.b16 %v2042, %v2039
        %v2067 = vpack.c.b16 %v2043, %v2040
        %v2068 = vpack.c.b16 %v2044, %v2041
        %2093 = vmatpush.bf16.msra.mxu0 %v2066
        %2094 = vmatpush.bf16.msra.mxu0 %v2063
        %2095 = vmatpush.bf16.msra.mxu0 %v2060
        %2096 = vmatpush.bf16.msra.mxu0 %v2057
        %2097 = vmatpush.bf16.msra.mxu0 %v2054
        %2098 = vmatpush.bf16.msra.mxu0 %v2051
        %2099 = vmatpush.bf16.msra.mxu0 %v2048
        %2100 = vmatpush.bf16.msra.mxu0 %v2045
        %2101 = vmatmul.bf16.gmra.mxu0 %v1964
        %v2102 = vpop.f32.mrf.mxu0
        %v2103 = vadd.f32 0.0, %v2102
        %v2104 = vpop.f32.mrf.mxu0
        %2105 = vdwg.mxu0
        %2106 = vmatpush.bf16.msra.mxu0 %v2067
        %2107 = vmatpush.bf16.msra.mxu0 %v2064
        %2108 = vmatpush.bf16.msra.mxu0 %v2061
        %2109 = vmatpush.bf16.msra.mxu0 %v2058
        %2110 = vmatpush.bf16.msra.mxu0 %v2055
        %2111 = vmatpush.bf16.msra.mxu0 %v2052
        %2112 = vmatpush.bf16.msra.mxu0 %v2049
        %2113 = vmatpush.bf16.msra.mxu0 %v2046
        %2114 = vmatmul.bf16.gmra.mxu0 %v1964
        %v2115 = vpop.f32.mrf.mxu0
        %v2116 = vadd.f32 0.0, %v2115
        %v2117 = vpop.f32.mrf.mxu0
        %2118 = vdwg.mxu0
        %2119 = vmatpush.bf16.msra.mxu0 %v2068
        %2120 = vmatpush.bf16.msra.mxu0 %v2065
        %2121 = vmatpush.bf16.msra.mxu0 %v2062
        %2122 = vmatpush.bf16.msra.mxu0 %v2059
        %2123 = vmatpush.bf16.msra.mxu0 %v2056
        %2124 = vmatpush.bf16.msra.mxu0 %v2053
        %2125 = vmatpush.bf16.msra.mxu0 %v2050
        %2126 = vmatpush.bf16.msra.mxu0 %v2047
        %2127 = vmatmul.bf16.gmra.mxu0 %v1964
        %v2128 = vpop.f32.mrf.mxu0
        %v2129 = vadd.f32 0.0, %v2128
        %v2130 = vpop.f32.mrf.mxu0
        %2131 = vdwg.mxu0
        %v2132 = vpack.c.bf16 %v1702, %v1702
        %v2149 = vunpack.c.l.b16 %v1929
        %v2150 = vunpack.c.h.b16 %v1929
        %v2151 = vunpack.c.l.b16 %v1930
        %v2152 = vunpack.c.h.b16 %v1930
        %v2153 = vunpack.c.l.b16 %v1931
        %v2154 = vunpack.c.h.b16 %v1931
        %v2155 = vunpack.c.l.b16 %v1932
        %v2156 = vunpack.c.h.b16 %v1932
        %v2157 = vunpack.c.l.b16 %v1933
        %v2158 = vunpack.c.h.b16 %v1933
        %v2159 = vunpack.c.l.b16 %v1934
        %v2160 = vunpack.c.h.b16 %v1934
        %v2161 = vunpack.c.l.b16 %v1935
        %v2162 = vunpack.c.h.b16 %v1935
        %v2163 = vunpack.c.l.b16 %v1936
        %v2164 = vunpack.c.h.b16 %v1936
        %v2165 = vunpack.c.l.b16 %v1937
        %v2166 = vunpack.c.h.b16 %v1937
        %v2167 = vunpack.c.l.b16 %v1938
        %v2168 = vunpack.c.h.b16 %v1938
        %v2169 = vunpack.c.l.b16 %v1939
        %v2170 = vunpack.c.h.b16 %v1939
        %v2171 = vunpack.c.l.b16 %v1940
        %v2172 = vunpack.c.h.b16 %v1940
        %v2173 = vunpack.c.l.b16 %v1941
        %v2174 = vunpack.c.h.b16 %v1941
        %v2175 = vunpack.c.l.b16 %v1942
        %v2176 = vunpack.c.h.b16 %v1942
        %v2177 = vunpack.c.l.b16 %v1943
        %v2178 = vunpack.c.h.b16 %v1943
        %v2179 = vunpack.c.l.b16 %v1944
        %v2180 = vunpack.c.h.b16 %v1944
        %v2181 = vpack.c.b16 %v2151, %v2149
        %v2182 = vpack.c.b16 %v2152, %v2150
        %v2183 = vpack.c.b16 %v2155, %v2153
        %v2184 = vpack.c.b16 %v2156, %v2154
        %v2185 = vpack.c.b16 %v2159, %v2157
        %v2186 = vpack.c.b16 %v2160, %v2158
        %v2187 = vpack.c.b16 %v2163, %v2161
        %v2188 = vpack.c.b16 %v2164, %v2162
        %v2189 = vpack.c.b16 %v2167, %v2165
        %v2190 = vpack.c.b16 %v2168, %v2166
        %v2191 = vpack.c.b16 %v2171, %v2169
        %v2192 = vpack.c.b16 %v2172, %v2170
        %v2193 = vpack.c.b16 %v2175, %v2173
        %v2194 = vpack.c.b16 %v2176, %v2174
        %v2195 = vpack.c.b16 %v2179, %v2177
        %v2196 = vpack.c.b16 %v2180, %v2178
        %2213 = vmatpush.bf16.msra.mxu0 %v2195
        %2214 = vmatpush.bf16.msra.mxu0 %v2193
        %2215 = vmatpush.bf16.msra.mxu0 %v2191
        %2216 = vmatpush.bf16.msra.mxu0 %v2189
        %2217 = vmatpush.bf16.msra.mxu0 %v2187
        %2218 = vmatpush.bf16.msra.mxu0 %v2185
        %2219 = vmatpush.bf16.msra.mxu0 %v2183
        %2220 = vmatpush.bf16.msra.mxu0 %v2181
        %2221 = vmatmul.bf16.gmra.mxu0 %v2132
        %v2222 = vpop.f32.mrf.mxu0
        %v2223 = vadd.f32 0.0, %v2222
        %v2224 = vpop.f32.mrf.mxu0
        %2225 = vdwg.mxu0
        %2226 = vmatpush.bf16.msra.mxu0 %v2196
        %2227 = vmatpush.bf16.msra.mxu0 %v2194
        %2228 = vmatpush.bf16.msra.mxu0 %v2192
        %2229 = vmatpush.bf16.msra.mxu0 %v2190
        %2230 = vmatpush.bf16.msra.mxu0 %v2188
        %2231 = vmatpush.bf16.msra.mxu0 %v2186
        %2232 = vmatpush.bf16.msra.mxu0 %v2184
        %2233 = vmatpush.bf16.msra.mxu0 %v2182
        %2234 = vmatmul.bf16.gmra.mxu0 %v2132
        %v2235 = vpop.f32.mrf.mxu0
        %v2236 = vadd.f32 0.0, %v2235
        %v2237 = vpop.f32.mrf.mxu0
        %2238 = vdwg.mxu0
        %v2239 = vadd.f32 %v2103, %v2223
        %v2240 = vadd.f32 %v2116, %v2236
        %v2242 = vperm.slane %v1963, 0
        %v2243 = vperm.slane %v1963, 1
        %v2246 = vsub.f32 %v2239, %v2242
        %v2247 = vsub.f32 %v2240, %v2243
        %v2248 = vxor.u32 %v2246, 2147483648
        %v2249 = vxor.u32 %v2247, 2147483648
        %v2250 = vmul.f32 %v2248, 1.442695
        %v2251 = vpow.pop %v2250
        %v2252 = vmul.f32 %v2249, 1.442695
        %v2253 = vpow.pop %v2252
        %v2254 = vadd.f32 %v2251, 1.0
        %v2255 = vadd.f32 %v2253, 1.0
        %v2256 = vrcp.pop %v2254
        %v2257 = vmul.f32 %v2254, %v2256
        %v2258 = vsub.f32 1.0, %v2257
        %v2259 = vmul.f32 %v2256, %v2258
        %v2260 = vadd.f32 %v2256, %v2259
        %vm2261 = vweird.f32 %v2254
        %vm2262 = vweird.f32 %v2256
        %vm2263 = vmor %vm2261, %vm2262
        %v2264 = vsel %vm2263, %v2256, %v2260
        %v2265 = vand.u32 2147483647, %v2254
        %vm2266 = vcmp.eq.f32.partialorder %v2265, 8.507059e+37
        %v2267 = vand.u32 %v2254, 2147483648
        %v2268 = vor.u32 1.1754944e-38, %v2267
        %v2269 = vsel %vm2266, %v2268, %v2264
        %v2270 = vmul.f32 1.0, %v2269
        %v2271 = vrcp.pop %v2255
        %v2272 = vmul.f32 %v2255, %v2271
        %v2273 = vsub.f32 1.0, %v2272
        %v2274 = vmul.f32 %v2271, %v2273
        %v2275 = vadd.f32 %v2271, %v2274
        %vm2276 = vweird.f32 %v2255
        %vm2277 = vweird.f32 %v2271
        %vm2278 = vmor %vm2276, %vm2277
        %v2279 = vsel %vm2278, %v2271, %v2275
        %v2280 = vand.u32 2147483647, %v2255
        %vm2281 = vcmp.eq.f32.partialorder %v2280, 8.507059e+37
        %v2282 = vand.u32 %v2255, 2147483648
        %v2283 = vor.u32 1.1754944e-38, %v2282
        %v2284 = vsel %vm2281, %v2283, %v2279
        %v2285 = vmul.f32 1.0, %v2284
        %v2286 = vmul.f32 %v2270, %v1702
        %v2287 = vpack.c.bf16 %v2286, %v2286
        %v2304 = vunpack.c.l.b16 %v1946
        %v2305 = vunpack.c.l.b16 %v1947
        %v2306 = vunpack.c.l.b16 %v1948
        %v2307 = vunpack.c.l.b16 %v1949
        %v2308 = vunpack.c.l.b16 %v1950
        %v2309 = vunpack.c.l.b16 %v1951
        %v2310 = vunpack.c.l.b16 %v1952
        %v2311 = vunpack.c.l.b16 %v1953
        %v2312 = vunpack.c.l.b16 %v1954
        %v2313 = vunpack.c.l.b16 %v1955
        %v2314 = vunpack.c.l.b16 %v1956
        %v2315 = vunpack.c.l.b16 %v1957
        %v2316 = vunpack.c.l.b16 %v1958
        %v2317 = vunpack.c.l.b16 %v1959
        %v2318 = vunpack.c.l.b16 %v1960
        %v2319 = vunpack.c.l.b16 %v1961
        %v2320 = vpack.c.b16 %v2305, %v2304
        %v2321 = vpack.c.b16 %v2307, %v2306
        %v2322 = vpack.c.b16 %v2309, %v2308
        %v2323 = vpack.c.b16 %v2311, %v2310
        %v2324 = vpack.c.b16 %v2313, %v2312
        %v2325 = vpack.c.b16 %v2315, %v2314
        %v2326 = vpack.c.b16 %v2317, %v2316
        %v2327 = vpack.c.b16 %v2319, %v2318
        %2336 = vmatpush.bf16.msra.mxu0 %v2327
        %2337 = vmatpush.bf16.msra.mxu0 %v2326
        %2338 = vmatpush.bf16.msra.mxu0 %v2325
        %2339 = vmatpush.bf16.msra.mxu0 %v2324
        %2340 = vmatpush.bf16.msra.mxu0 %v2323
        %2341 = vmatpush.bf16.msra.mxu0 %v2322
        %2342 = vmatpush.bf16.msra.mxu0 %v2321
        %2343 = vmatpush.bf16.msra.mxu0 %v2320
        %2344 = vmatmul.bf16.gmra.mxu0 %v2287
        %v2345 = vpop.f32.mrf.mxu0
        %v2346 = vadd.f32 0.0, %v2345
        %v2347 = vpop.f32.mrf.mxu0
        %2348 = vdwg.mxu0
        %v2349 = vadd.f32 %v2129, %v2346
        %v2350 = vtanh.pop %v2349
        %v2351 = vsub.f32 %v2350, %v1702
        %v2352 = vmul.f32 %v2285, %v2351
        %v2353 = vadd.f32 %v1702, %v2352
        %2354 = vst [vmem:[%s629] sm:$0xff] %v2353
        %s2355 = sand.u32 %s343, 1
        %s2356 = scalar_lea.sflag [#allocation4], %s2355
        %s2357 = sand.u32 %s343, 1
        %s2358 = smul.addr %s2357, 8
        %s2359 = scalar_lea.vmem [#allocation19], %s2358
        // Predicated region
        $region117: #{tpu_custom_call.1} parent=75 // pred_check
          %p2360 = pneg %p353
        $region118: #{tpu_custom_call.1} parent=75 // pred_check_branch
          %2362 = sbr.rel (%p2360) target = $region120
        $region119: #{tpu_custom_call.1} parent=75 // pred_region
          %2364 = vsyncadd %s2356, 0
          %s2365 = smul.addr %s36, 8
          %s2366 = scalar_lea.hbm %s14, %s2365
          %s2368 = sshll.u32 %s2359, 4
          %s2369 = int_to_ptr.vmem [resolvable:$true] %s2368
          %s2370 = sshll.u32 %s2366, 4
          %s2371 = int_to_ptr.hbm [resolvable:$true] %s2370
          %2373 = dma.vmem_to_hbm [thread:$0]  %s2369, 128, %s2371, %s2356
        $region120: #{tpu_custom_call.1} parent=75 // pred_fallthru
          _
      $region76: #{tpu_custom_call.1} parent=5 // pred_fallthru
        _
      %p2374 = scmp.le.s32.totalorder 2, %s31
      // Predicated region
      $region121: #{tpu_custom_call.1} parent=5 // pred_check
        %p2375 = pneg %p2374
      $region122: #{tpu_custom_call.1} parent=5 // pred_check_branch
        %2377 = sbr.rel (%p2375) target = $region124
      $region123: #{tpu_custom_call.1} parent=5 // pred_region
        %s2378 = ssub.s32 %s31, 2
        // Predicated region
        $region125: #{tpu_custom_call.1} parent=123 // pred_check
          %p2379 = pneg %p359
        $region126: #{tpu_custom_call.1} parent=123 // pred_check_branch
          %2381 = sbr.rel (%p2379) target = $region128
        $region127: #{tpu_custom_call.1} parent=123 // pred_region
          %s2382 = sand.u32 %s344, 1
          %s2383 = scalar_lea.sflag [#allocation4], %s2382
          %s2384 = sand.u32 %s344, 1
          %s2385 = smul.addr %s2384, 8
          %s2386 = scalar_lea.vmem [#allocation19], %s2385
          %2388 = dma.done %s2383, 128
        $region128: #{tpu_custom_call.1} parent=123 // pred_fallthru
          _
      $region124: #{tpu_custom_call.1} parent=5 // pred_fallthru
        _
    $region6: #{tpu_custom_call.1} parent=1 // loop_footer
      %s35 = sadd.s32 1, %s31
    $region7: #{tpu_custom_call.1} parent=1 // loop_footer_branch
      %30 = sbr.rel target = $region3
    $region8: #{tpu_custom_call.1} parent=1 // loop_exit
      _
    %2389 = vsyncpa [#allocation3], 1
    %s2390 = scalar_lea.sflag [#allocation3], 1
    %2391 = vsyncpa %s2390, 1
    %2392 = vsyncpa [#allocation6], 1
    %2393 = vsyncpa [#allocation9], 1
    %2394 = vsyncpa [#allocation12], 1
    %2395 = vsyncpa [#allocation15], 1
    %2396 = vsyncpa [#allocation18], 1
    %2397 = vsyncpa [#allocation4], 1
    %s2398 = scalar_lea.sflag [#allocation4], 1
    %2399 = vsyncpa %s2398, 1

</llo_original>
